<compile_context>
chip_gen: v6e
topology: v6e:2x2x1
jax: 0.10.0
libtpu: 0.0.40
codegen_flags: <defaults>
</compile_context>

<pallas_src>
import math

import jax
import jax.numpy as jnp
from jax.experimental import pallas as pl
from jax.experimental.pallas import tpu as pltpu  # noqa: F401  (TPU backend)

# ----------------------------- model dims ---------------------------------
B = 2          # batch
S = 8          # sequence length
H = 32         # hidden size
NUM_HEADS = 4
HEAD_DIM = H // NUM_HEADS   # 8


# ----------------------------- Pallas kernel -------------------------------
def _attention_kernel(x_ref, wqkv_ref, wo_ref, o_ref):
    """Single grid step: whole batch at once, x is (B*S, H)."""
    x = x_ref[...]                                            # (B*S, H) f32

    # Fused QKV projection: one MXU matmul with N = 3H.
    qkv = jnp.dot(x, wqkv_ref[...],
                  preferred_element_type=jnp.float32)         # (B*S, 3H)

    # Split q/k/v (lane slices) and unfold batch on the leading axis.
    # NOTE: the softmax scale 1/sqrt(HEAD_DIM) is pre-folded into the Wq
    # columns of wqkv at construction time.
    q = qkv[:, 0 * H:1 * H].reshape(B, S, H)                  # (B, S, H)
    k = qkv[:, 1 * H:2 * H].reshape(B, S, H)
    v = qkv[:, 2 * H:3 * H].reshape(B, S, H)

    # Per-head attention, batched over B with 3-D (single-batch-dim) einsums.
    # TODO(synk): a single (b,h)-batched 4-D contraction would remove the
    # remaining head loop, but multi-batch-dim dot_general lowering is risky.
    head_outs = []
    for h in range(NUM_HEADS):
        lo = h * HEAD_DIM
        hi = lo + HEAD_DIM
        q_h = q[:, :, lo:hi]                                  # (B, S, D)
        k_h = k[:, :, lo:hi]
        v_h = v[:, :, lo:hi]

        s = jnp.einsum('bqd,bkd->bqk', q_h, k_h,
                       preferred_element_type=jnp.float32)    # (B, S, S)
        m = jnp.max(s, axis=-1, keepdims=True)
        p = jnp.exp(s - m)
        denom = jnp.sum(p, axis=-1, keepdims=True)
        attn = p * pl.reciprocal(denom, approx=True)          # EUP vrcp
        head_outs.append(
            jnp.einsum('bqk,bkd->bqd', attn, v_h,
                       preferred_element_type=jnp.float32))   # (B, S, D)

    ctx = jnp.concatenate(head_outs, axis=-1)                 # (B, S, H)

    # Output projection back in the (B*S, H) layout.
    out = jnp.dot(ctx.reshape(B * S, H), wo_ref[...],
                  preferred_element_type=jnp.float32)         # (B*S, H)
    o_ref[...] = out.astype(o_ref.dtype)


def attention_forward(x, wqkv, wo):
    """x: (B, S, H) f32; wqkv: (H, 3H); wo: (H, H).  Returns (B, S, H)."""
    Bx, Sx, Hx = x.shape
    x2 = x.reshape(Bx * Sx, Hx)                               # batch rides sublanes
    out2 = pl.pallas_call(
        _attention_kernel,
        out_shape=jax.ShapeDtypeStruct((Bx * Sx, Hx), x.dtype),
        in_specs=[
            pl.BlockSpec((Bx * Sx, Hx), lambda: (0, 0)),      # x (full block)
            pl.BlockSpec((Hx, 3 * Hx), lambda: (0, 0)),       # fused Wqkv
            pl.BlockSpec((Hx, Hx), lambda: (0, 0)),           # Wo
        ],
        out_specs=pl.BlockSpec((Bx * Sx, Hx), lambda: (0, 0)),
    )(x2, wqkv, wo)
    return out2.reshape(Bx, Sx, Hx)


# ------------------------ module-level wrappers ----------------------------
class SimpleAttention:
    """The wrapped attention module (deterministic synthetic weights)."""

    def __init__(self, layer_idx, key):
        self.layer_idx = layer_idx
        k1, k2, k3, k4 = jax.random.split(key, 4)
        wscale = 1.0 / math.sqrt(H)
        self.wq = jax.random.normal(k1, (H, H), jnp.float32) * wscale
        self.wk = jax.random.normal(k2, (H, H), jnp.float32) * wscale
        self.wv = jax.random.normal(k3, (H, H), jnp.float32) * wscale
        self.wo = jax.random.normal(k4, (H, H), jnp.float32) * wscale
        # Fused QKV weight with the softmax scale folded into Wq (one-time).
        qk_scale = 1.0 / math.sqrt(HEAD_DIM)
        self.wqkv = jnp.concatenate(
            [self.wq * qk_scale, self.wk, self.wv], axis=1)   # (H, 3H)

    def __call__(self, hidden_states, *args, **kwargs):
        out = attention_forward(hidden_states, self.wqkv, self.wo)
        # Mirror HF-style attention return: (attn_output, attn_weights_or_None)
        return (out, None)


class AttentionSpy:
    """Faithful port of the PyTorch AttentionSpy: pass-through + recording."""

    def __init__(self, attn):
        self.attn = attn
        self.layer_idx = attn.layer_idx
        self.inputs = None
        self.outputs = None

    def __call__(self, *args, **kwargs):
        inputs = args[0]
        outputs = self.attn(*args, **kwargs)
        self.inputs = inputs
        self.outputs = outputs[0]
        return outputs


# --------------------------- reference check -------------------------------
def _reference(x, wq, wk, wv, wo):
    q = x @ wq
    k = x @ wk
    v = x @ wv
    q = q.reshape(B, S, NUM_HEADS, HEAD_DIM).transpose(0, 2, 1, 3)
    k = k.reshape(B, S, NUM_HEADS, HEAD_DIM).transpose(0, 2, 1, 3)
    v = v.reshape(B, S, NUM_HEADS, HEAD_DIM).transpose(0, 2, 1, 3)
    s = jnp.einsum("bhqd,bhkd->bhqk", q, k) / math.sqrt(HEAD_DIM)
    p = jax.nn.softmax(s, axis=-1)
    ctx = jnp.einsum("bhqk,bhkd->bhqd", p, v)
    ctx = ctx.transpose(0, 2, 1, 3).reshape(B, S, H)
    return ctx @ wo


if __name__ == "__main__":
    key = jax.random.PRNGKey(0)
    kx, kw = jax.random.split(key)
    x = jax.random.normal(kx, (B, S, H), jnp.float32)

    attn = SimpleAttention(layer_idx=0, key=kw)
    spy = AttentionSpy(attn)

    outputs = spy(x)
    out = jax.block_until_ready(outputs[0])

    ref = _reference(x, attn.wq, attn.wk, attn.wv, attn.wo)
    assert out.shape == (B, S, H)
    assert spy.outputs is outputs[0]
    assert spy.inputs is x
    # Tolerance loosened slightly vs. 1e-4 because the softmax denominator now
    # uses the approximate (EUP) reciprocal per the performance review.
    assert jnp.allclose(out, ref, atol=1e-2, rtol=1e-2), "mismatch vs reference"

    print("KERNEL_OK")
</pallas_src>

<mosaic_0001>
module attributes {stable_mosaic.version = 11 : i64} {
  func.func @_attention_kernel(%arg0: memref<16x32xf32, #tpu.memory_space<vmem>>, %arg1: memref<32x96xf32, #tpu.memory_space<vmem>>, %arg2: memref<32x32xf32, #tpu.memory_space<vmem>>, %arg3: memref<16x32xf32, #tpu.memory_space<vmem>>) attributes {dimension_semantics = [], scalar_prefetch = 0 : i64, scratch_operands = 0 : i64, tpu.core_type = #tpu.core_type<tc>} {
    %c0 = arith.constant 0 : index
    %c0_0 = arith.constant 0 : index
    %0 = vector.load %arg0[%c0, %c0_0] : memref<16x32xf32, #tpu.memory_space<vmem>>, vector<16x32xf32>
    %c0_1 = arith.constant 0 : index
    %c0_2 = arith.constant 0 : index
    %1 = vector.load %arg1[%c0_1, %c0_2] : memref<32x96xf32, #tpu.memory_space<vmem>>, vector<32x96xf32>
    %cst = arith.constant dense<0.000000e+00> : vector<16x96xf32>
    %2 = tpu.matmul %0, %1, %cst {dimension_numbers = #tpu.dot_dimension_numbers<[1], [0], [0], [1], [0, 0, 1, 1], [], []>} : vector<16x32xf32>, vector<32x96xf32>, vector<16x96xf32> -> vector<16x96xf32>
    %3 = vector.extract_strided_slice %2 {offsets = [0, 0], sizes = [16, 32], strides = [1, 1]} : vector<16x96xf32> to vector<16x32xf32>
    %4 = vector.shape_cast %3 : vector<16x32xf32> to vector<2x8x32xf32>
    %5 = vector.extract_strided_slice %2 {offsets = [0, 32], sizes = [16, 32], strides = [1, 1]} : vector<16x96xf32> to vector<16x32xf32>
    %6 = vector.shape_cast %5 : vector<16x32xf32> to vector<2x8x32xf32>
    %7 = vector.extract_strided_slice %2 {offsets = [0, 64], sizes = [16, 32], strides = [1, 1]} : vector<16x96xf32> to vector<16x32xf32>
    %8 = vector.shape_cast %7 : vector<16x32xf32> to vector<2x8x32xf32>
    %9 = vector.extract_strided_slice %4 {offsets = [0, 0, 0], sizes = [2, 8, 8], strides = [1, 1, 1]} : vector<2x8x32xf32> to vector<2x8x8xf32>
    %10 = vector.extract_strided_slice %6 {offsets = [0, 0, 0], sizes = [2, 8, 8], strides = [1, 1, 1]} : vector<2x8x32xf32> to vector<2x8x8xf32>
    %11 = vector.extract_strided_slice %8 {offsets = [0, 0, 0], sizes = [2, 8, 8], strides = [1, 1, 1]} : vector<2x8x32xf32> to vector<2x8x8xf32>
    "tpu.trace_start"() <{level = 10 : i32, message = "bqd,bkd->bqk"}> : () -> ()
    %cst_3 = arith.constant dense<0.000000e+00> : vector<2x8x8xf32>
    %12 = tpu.matmul %9, %10, %cst_3 {dimension_numbers = #tpu.dot_dimension_numbers<[2], [2], [1], [1], [0, 0, 0, 1, 1, 1], [0], [0]>} : vector<2x8x8xf32>, vector<2x8x8xf32>, vector<2x8x8xf32> -> vector<2x8x8xf32>
    "tpu.trace_stop"() : () -> ()
    %cst_4 = arith.constant dense<0xFF800000> : vector<2x8xf32>
    %13 = vector.multi_reduction <maximumf>, %12, %cst_4 [2] : vector<2x8x8xf32> to vector<2x8xf32>
    %14 = vector.shape_cast %13 : vector<2x8xf32> to vector<2x8x1xf32>
    %15 = vector.broadcast %14 : vector<2x8x1xf32> to vector<2x8x8xf32>
    %16 = arith.subf %12, %15 : vector<2x8x8xf32>
    %17 = math.exp %16 : vector<2x8x8xf32>
    %cst_5 = arith.constant dense<0.000000e+00> : vector<2x8xf32>
    %18 = vector.multi_reduction <add>, %17, %cst_5 [2] : vector<2x8x8xf32> to vector<2x8xf32>
    %19 = vector.shape_cast %18 : vector<2x8xf32> to vector<2x8x1xf32>
    %20 = tpu.reciprocal %19 {approx = true} : vector<2x8x1xf32> -> vector<2x8x1xf32>
    %21 = vector.broadcast %20 : vector<2x8x1xf32> to vector<2x8x8xf32>
    %22 = arith.mulf %17, %21 : vector<2x8x8xf32>
    "tpu.trace_start"() <{level = 10 : i32, message = "bqk,bkd->bqd"}> : () -> ()
    %cst_6 = arith.constant dense<0.000000e+00> : vector<2x8x8xf32>
    %23 = tpu.matmul %22, %11, %cst_6 {dimension_numbers = #tpu.dot_dimension_numbers<[2], [1], [1], [2], [0, 0, 0, 1, 1, 2], [0], [0]>} : vector<2x8x8xf32>, vector<2x8x8xf32>, vector<2x8x8xf32> -> vector<2x8x8xf32>
    "tpu.trace_stop"() : () -> ()
    %24 = vector.extract_strided_slice %4 {offsets = [0, 0, 8], sizes = [2, 8, 8], strides = [1, 1, 1]} : vector<2x8x32xf32> to vector<2x8x8xf32>
    %25 = vector.extract_strided_slice %6 {offsets = [0, 0, 8], sizes = [2, 8, 8], strides = [1, 1, 1]} : vector<2x8x32xf32> to vector<2x8x8xf32>
    %26 = vector.extract_strided_slice %8 {offsets = [0, 0, 8], sizes = [2, 8, 8], strides = [1, 1, 1]} : vector<2x8x32xf32> to vector<2x8x8xf32>
    "tpu.trace_start"() <{level = 10 : i32, message = "bqd,bkd->bqk"}> : () -> ()
    %cst_7 = arith.constant dense<0.000000e+00> : vector<2x8x8xf32>
    %27 = tpu.matmul %24, %25, %cst_7 {dimension_numbers = #tpu.dot_dimension_numbers<[2], [2], [1], [1], [0, 0, 0, 1, 1, 1], [0], [0]>} : vector<2x8x8xf32>, vector<2x8x8xf32>, vector<2x8x8xf32> -> vector<2x8x8xf32>
    "tpu.trace_stop"() : () -> ()
    %cst_8 = arith.constant dense<0xFF800000> : vector<2x8xf32>
    %28 = vector.multi_reduction <maximumf>, %27, %cst_8 [2] : vector<2x8x8xf32> to vector<2x8xf32>
    %29 = vector.shape_cast %28 : vector<2x8xf32> to vector<2x8x1xf32>
    %30 = vector.broadcast %29 : vector<2x8x1xf32> to vector<2x8x8xf32>
    %31 = arith.subf %27, %30 : vector<2x8x8xf32>
    %32 = math.exp %31 : vector<2x8x8xf32>
    %cst_9 = arith.constant dense<0.000000e+00> : vector<2x8xf32>
    %33 = vector.multi_reduction <add>, %32, %cst_9 [2] : vector<2x8x8xf32> to vector<2x8xf32>
    %34 = vector.shape_cast %33 : vector<2x8xf32> to vector<2x8x1xf32>
    %35 = tpu.reciprocal %34 {approx = true} : vector<2x8x1xf32> -> vector<2x8x1xf32>
    %36 = vector.broadcast %35 : vector<2x8x1xf32> to vector<2x8x8xf32>
    %37 = arith.mulf %32, %36 : vector<2x8x8xf32>
    "tpu.trace_start"() <{level = 10 : i32, message = "bqk,bkd->bqd"}> : () -> ()
    %cst_10 = arith.constant dense<0.000000e+00> : vector<2x8x8xf32>
    %38 = tpu.matmul %37, %26, %cst_10 {dimension_numbers = #tpu.dot_dimension_numbers<[2], [1], [1], [2], [0, 0, 0, 1, 1, 2], [0], [0]>} : vector<2x8x8xf32>, vector<2x8x8xf32>, vector<2x8x8xf32> -> vector<2x8x8xf32>
    "tpu.trace_stop"() : () -> ()
    %39 = vector.extract_strided_slice %4 {offsets = [0, 0, 16], sizes = [2, 8, 8], strides = [1, 1, 1]} : vector<2x8x32xf32> to vector<2x8x8xf32>
    %40 = vector.extract_strided_slice %6 {offsets = [0, 0, 16], sizes = [2, 8, 8], strides = [1, 1, 1]} : vector<2x8x32xf32> to vector<2x8x8xf32>
    %41 = vector.extract_strided_slice %8 {offsets = [0, 0, 16], sizes = [2, 8, 8], strides = [1, 1, 1]} : vector<2x8x32xf32> to vector<2x8x8xf32>
    "tpu.trace_start"() <{level = 10 : i32, message = "bqd,bkd->bqk"}> : () -> ()
    %cst_11 = arith.constant dense<0.000000e+00> : vector<2x8x8xf32>
    %42 = tpu.matmul %39, %40, %cst_11 {dimension_numbers = #tpu.dot_dimension_numbers<[2], [2], [1], [1], [0, 0, 0, 1, 1, 1], [0], [0]>} : vector<2x8x8xf32>, vector<2x8x8xf32>, vector<2x8x8xf32> -> vector<2x8x8xf32>
    "tpu.trace_stop"() : () -> ()
    %cst_12 = arith.constant dense<0xFF800000> : vector<2x8xf32>
    %43 = vector.multi_reduction <maximumf>, %42, %cst_12 [2] : vector<2x8x8xf32> to vector<2x8xf32>
    %44 = vector.shape_cast %43 : vector<2x8xf32> to vector<2x8x1xf32>
    %45 = vector.broadcast %44 : vector<2x8x1xf32> to vector<2x8x8xf32>
    %46 = arith.subf %42, %45 : vector<2x8x8xf32>
    %47 = math.exp %46 : vector<2x8x8xf32>
    %cst_13 = arith.constant dense<0.000000e+00> : vector<2x8xf32>
    %48 = vector.multi_reduction <add>, %47, %cst_13 [2] : vector<2x8x8xf32> to vector<2x8xf32>
    %49 = vector.shape_cast %48 : vector<2x8xf32> to vector<2x8x1xf32>
    %50 = tpu.reciprocal %49 {approx = true} : vector<2x8x1xf32> -> vector<2x8x1xf32>
    %51 = vector.broadcast %50 : vector<2x8x1xf32> to vector<2x8x8xf32>
    %52 = arith.mulf %47, %51 : vector<2x8x8xf32>
    "tpu.trace_start"() <{level = 10 : i32, message = "bqk,bkd->bqd"}> : () -> ()
    %cst_14 = arith.constant dense<0.000000e+00> : vector<2x8x8xf32>
    %53 = tpu.matmul %52, %41, %cst_14 {dimension_numbers = #tpu.dot_dimension_numbers<[2], [1], [1], [2], [0, 0, 0, 1, 1, 2], [0], [0]>} : vector<2x8x8xf32>, vector<2x8x8xf32>, vector<2x8x8xf32> -> vector<2x8x8xf32>
    "tpu.trace_stop"() : () -> ()
    %54 = vector.extract_strided_slice %4 {offsets = [0, 0, 24], sizes = [2, 8, 8], strides = [1, 1, 1]} : vector<2x8x32xf32> to vector<2x8x8xf32>
    %55 = vector.extract_strided_slice %6 {offsets = [0, 0, 24], sizes = [2, 8, 8], strides = [1, 1, 1]} : vector<2x8x32xf32> to vector<2x8x8xf32>
    %56 = vector.extract_strided_slice %8 {offsets = [0, 0, 24], sizes = [2, 8, 8], strides = [1, 1, 1]} : vector<2x8x32xf32> to vector<2x8x8xf32>
    "tpu.trace_start"() <{level = 10 : i32, message = "bqd,bkd->bqk"}> : () -> ()
    %cst_15 = arith.constant dense<0.000000e+00> : vector<2x8x8xf32>
    %57 = tpu.matmul %54, %55, %cst_15 {dimension_numbers = #tpu.dot_dimension_numbers<[2], [2], [1], [1], [0, 0, 0, 1, 1, 1], [0], [0]>} : vector<2x8x8xf32>, vector<2x8x8xf32>, vector<2x8x8xf32> -> vector<2x8x8xf32>
    "tpu.trace_stop"() : () -> ()
    %cst_16 = arith.constant dense<0xFF800000> : vector<2x8xf32>
    %58 = vector.multi_reduction <maximumf>, %57, %cst_16 [2] : vector<2x8x8xf32> to vector<2x8xf32>
    %59 = vector.shape_cast %58 : vector<2x8xf32> to vector<2x8x1xf32>
    %60 = vector.broadcast %59 : vector<2x8x1xf32> to vector<2x8x8xf32>
    %61 = arith.subf %57, %60 : vector<2x8x8xf32>
    %62 = math.exp %61 : vector<2x8x8xf32>
    %cst_17 = arith.constant dense<0.000000e+00> : vector<2x8xf32>
    %63 = vector.multi_reduction <add>, %62, %cst_17 [2] : vector<2x8x8xf32> to vector<2x8xf32>
    %64 = vector.shape_cast %63 : vector<2x8xf32> to vector<2x8x1xf32>
    %65 = tpu.reciprocal %64 {approx = true} : vector<2x8x1xf32> -> vector<2x8x1xf32>
    %66 = vector.broadcast %65 : vector<2x8x1xf32> to vector<2x8x8xf32>
    %67 = arith.mulf %62, %66 : vector<2x8x8xf32>
    "tpu.trace_start"() <{level = 10 : i32, message = "bqk,bkd->bqd"}> : () -> ()
    %cst_18 = arith.constant dense<0.000000e+00> : vector<2x8x8xf32>
    %68 = tpu.matmul %67, %56, %cst_18 {dimension_numbers = #tpu.dot_dimension_numbers<[2], [1], [1], [2], [0, 0, 0, 1, 1, 2], [0], [0]>} : vector<2x8x8xf32>, vector<2x8x8xf32>, vector<2x8x8xf32> -> vector<2x8x8xf32>
    "tpu.trace_stop"() : () -> ()
    %69 = tpu.concatenate %23, %38, %53, %68 in 2 : vector<2x8x8xf32>, vector<2x8x8xf32>, vector<2x8x8xf32>, vector<2x8x8xf32> -> vector<2x8x32xf32>
    %70 = vector.shape_cast %69 : vector<2x8x32xf32> to vector<16x32xf32>
    %c0_19 = arith.constant 0 : index
    %c0_20 = arith.constant 0 : index
    %71 = vector.load %arg2[%c0_19, %c0_20] : memref<32x32xf32, #tpu.memory_space<vmem>>, vector<32x32xf32>
    %cst_21 = arith.constant dense<0.000000e+00> : vector<16x32xf32>
    %72 = tpu.matmul %70, %71, %cst_21 {dimension_numbers = #tpu.dot_dimension_numbers<[1], [0], [0], [1], [0, 0, 1, 1], [], []>} : vector<16x32xf32>, vector<32x32xf32>, vector<16x32xf32> -> vector<16x32xf32>
    %c0_22 = arith.constant 0 : index
    %c0_23 = arith.constant 0 : index
    %73 = vector.load %arg3[%c0_22, %c0_23] : memref<16x32xf32, #tpu.memory_space<vmem>>, vector<16x32xf32>
    tpu.vector_store %arg3[%c0_22, %c0_23], %72 {strides = array<i32>} : memref<16x32xf32, #tpu.memory_space<vmem>>, vector<16x32xf32>,
    return
  }
}

</mosaic_0001>

<llo_original>
// kernel: tpu_custom_call.1
$region0: #{tpu_custom_call.1}
  #allocation0 [shape = 'u32[]', space=smem, size = 0x4, offset = 0x4, fixed_abs, tag = 'smem constant byte address 0x4 - core index']
  #allocation1 [shape = 'u32[144,128]{1,0:T(1,128)}', space=vmem, size = 0x12000, scoped, tag = 'internal scratch']
  %s0 = inlined_call_operand.hbm [shape: f32[16,32], index: 0, kind: input, shape index: {}]
  %s1 = inlined_call_operand.hbm [shape: f32[32,96], index: 1, kind: input, shape index: {}]
  %s2 = inlined_call_operand.hbm [shape: f32[32,32], index: 2, kind: input, shape index: {}]
  %s3 = inlined_call_operand.hbm [shape: f32[16,32], index: 3, kind: output, shape index: {}]
  %s4 = sld [smem:[#allocation0]]
  $region34: #{tpu_custom_call.1} parent=0
    _
  %s6 = ssub.s32 1, %s4
  %s7 = scalar_select 0, %s6, %s4
  $region1: #{tpu_custom_call.1} parent=0
    #allocation2 [shape = 'u8[8192]{0}', space=vmem, size = 0x2000, scoped, tag = 'input window, operand 0, single buffered']
    #allocation3 [shape = 's32[1]{0}', space=sflag, size = 0x4, scoped, tag = 'scoped memory for tpu_custom_call.1']
    #allocation4 [shape = 's32[1]{0}', space=sflag, size = 0x4, scoped, tag = 'scoped memory for tpu_custom_call.1']
    #allocation5 [shape = 'u8[16384]{0}', space=vmem, size = 0x4000, scoped, tag = 'input window, operand 1, single buffered']
    #allocation6 [shape = 's32[1]{0}', space=sflag, size = 0x4, scoped, tag = 'scoped memory for tpu_custom_call.1']
    #allocation7 [shape = 'u8[16384]{0}', space=vmem, size = 0x4000, scoped, tag = 'input window, operand 2, single buffered']
    #allocation8 [shape = 'u8[8192]{0}', space=vmem, size = 0x2000, scoped, tag = 'output window, operand 0, single buffered']
    %8 = vsyncpa [#allocation3], 0
    %9 = vsyncpa [#allocation6], 0
    %10 = vsyncpa [#allocation4], 0
    // Predicated region
    $region2: #{tpu_custom_call.1} parent=1 // pred_check
      _
    $region3: #{tpu_custom_call.1} parent=1 // pred_check_branch
      %12 = sbr.rel (0) target = $region5
    $region4: #{tpu_custom_call.1} parent=1 // pred_region
      %s14 = ssub.s32 256, 256
      %15 = vsyncadd [#allocation3], %s14
      %s16 = sshll.u32 [#allocation2], 4
      %s17 = int_to_ptr.vmem [resolvable:$true] %s16
      %22 = dma.hbm_to_vmem [thread:$0]  %s0, 256, %s17, [#allocation3], 128, 128, 8
    $region5: #{tpu_custom_call.1} parent=1 // pred_fallthru
      _
    // Predicated region
    $region6: #{tpu_custom_call.1} parent=1 // pred_check
      _
    $region7: #{tpu_custom_call.1} parent=1 // pred_check_branch
      %24 = sbr.rel (0) target = $region9
    $region8: #{tpu_custom_call.1} parent=1 // pred_region
      %s26 = ssub.s32 512, 512
      %27 = vsyncadd [#allocation6], %s26
      %s28 = sshll.u32 [#allocation5], 4
      %s29 = int_to_ptr.vmem [resolvable:$true] %s28
      %34 = dma.hbm_to_vmem [thread:$0]  %s1, 512, %s29, [#allocation6], 128, 128, 8
    $region9: #{tpu_custom_call.1} parent=1 // pred_fallthru
      _
    // Predicated region
    $region10: #{tpu_custom_call.1} parent=1 // pred_check
      _
    $region11: #{tpu_custom_call.1} parent=1 // pred_check_branch
      %36 = sbr.rel (0) target = $region13
    $region12: #{tpu_custom_call.1} parent=1 // pred_region
      %s38 = ssub.s32 512, 512
      %39 = vsyncadd [#allocation6], %s38
      %s40 = sshll.u32 [#allocation7], 4
      %s41 = int_to_ptr.vmem [resolvable:$true] %s40
      %46 = dma.hbm_to_vmem [thread:$0]  %s2, 512, %s41, [#allocation6], 128, 128, 8
    $region13: #{tpu_custom_call.1} parent=1 // pred_fallthru
      _
    // Predicated region
    $region14: #{tpu_custom_call.1} parent=1 // pred_check
      _
    $region15: #{tpu_custom_call.1} parent=1 // pred_check_branch
      %48 = sbr.rel (0) target = $region17
    $region16: #{tpu_custom_call.1} parent=1 // pred_region
      %49 = dma.done [#allocation3], 256
    $region17: #{tpu_custom_call.1} parent=1 // pred_fallthru
      _
    // Predicated region
    $region18: #{tpu_custom_call.1} parent=1 // pred_check
      _
    $region19: #{tpu_custom_call.1} parent=1 // pred_check_branch
      %51 = sbr.rel (0) target = $region21
    $region20: #{tpu_custom_call.1} parent=1 // pred_region
      %52 = dma.done [#allocation6], 512
    $region21: #{tpu_custom_call.1} parent=1 // pred_fallthru
      _
    // Predicated region
    $region22: #{tpu_custom_call.1} parent=1 // pred_check
      _
    $region23: #{tpu_custom_call.1} parent=1 // pred_check_branch
      %54 = sbr.rel (0) target = $region25
    $region24: #{tpu_custom_call.1} parent=1 // pred_region
      %55 = dma.done [#allocation6], 512
    $region25: #{tpu_custom_call.1} parent=1 // pred_fallthru
      _
    %v56 = vld [vmem:[#allocation2] sm:$0xff]
    %v57 = vld [vmem:[#allocation2 + $0x8] sm:$0xff]
    %v58 = vld [vmem:[#allocation5] sm:$0xff]
    %v59 = vld [vmem:[#allocation5 + $0x8] sm:$0xff]
    %v60 = vld [vmem:[#allocation5 + $0x10] sm:$0xff]
    %v61 = vld [vmem:[#allocation5 + $0x18] sm:$0xff]
    %vm62 = vcmask 261120
    %v64 = vsel %vm62, %v56, 0
    %v67 = vsel %vm62, %v57, 0
    %69 = vmatprep.subr.mxu0 0.0
    %70 = vmatpush1.msra.mxu0 0.0
    %71 = vmatprep.subr.mxu0 0.0
    %72 = vmatpush1.msra.mxu0 0.0
    %73 = vmatprep.subr.mxu0 0.0
    %74 = vmatpush1.msra.mxu0 0.0
    %75 = vmatprep.subr.mxu0 0.0
    %76 = vmatpush1.msra.mxu0 0.0
    %77 = vmatprep.subr.mxu0 0.0
    %78 = vmatpush1.msra.mxu0 0.0
    %79 = vmatprep.subr.mxu0 0.0
    %80 = vmatpush1.msra.mxu0 0.0
    %81 = vmatprep.subr.mxu0 0.0
    %82 = vmatpush1.msra.mxu0 0.0
    %83 = vmatprep.subr.mxu0 0.0
    %84 = vmatpush1.msra.mxu0 0.0
    %85 = vmatprep.subr.mxu0 0.0
    %86 = vmatpush1.msra.mxu0 0.0
    %87 = vmatprep.subr.mxu0 0.0
    %88 = vmatpush1.msra.mxu0 0.0
    %89 = vmatprep.subr.mxu0 0.0
    %90 = vmatpush1.msra.mxu0 0.0
    %91 = vmatprep.subr.mxu0 0.0
    %92 = vmatpush1.msra.mxu0 0.0
    %93 = vmatprep.subr.mxu0 0.0
    %94 = vmatpush1.msra.mxu0 %v61
    %95 = vmatprep.subr.mxu0 0.0
    %96 = vmatpush1.msra.mxu0 %v60
    %97 = vmatprep.subr.mxu0 0.0
    %98 = vmatpush1.msra.mxu0 %v59
    %99 = vmatprep.subr.mxu0 0.0
    %100 = vmatpush1.msra.mxu0 %v58
    %101 = vmatprep.subr.mxu0 0.0
    %102 = vmatpush2.msra.mxu0 0.0
    %103 = vmatprep.subr.mxu0 0.0
    %104 = vmatpush2.msra.mxu0 0.0
    %105 = vmatprep.subr.mxu0 0.0
    %106 = vmatpush2.msra.mxu0 0.0
    %107 = vmatprep.subr.mxu0 0.0
    %108 = vmatpush2.msra.mxu0 0.0
    %109 = vmatprep.subr.mxu0 0.0
    %110 = vmatpush2.msra.mxu0 0.0
    %111 = vmatprep.subr.mxu0 0.0
    %112 = vmatpush2.msra.mxu0 0.0
    %113 = vmatprep.subr.mxu0 0.0
    %114 = vmatpush2.msra.mxu0 0.0
    %115 = vmatprep.subr.mxu0 0.0
    %116 = vmatpush2.msra.mxu0 0.0
    %117 = vmatprep.subr.mxu0 0.0
    %118 = vmatpush2.msra.mxu0 0.0
    %119 = vmatprep.subr.mxu0 0.0
    %120 = vmatpush2.msra.mxu0 0.0
    %121 = vmatprep.subr.mxu0 0.0
    %122 = vmatpush2.msra.mxu0 0.0
    %123 = vmatprep.subr.mxu0 0.0
    %124 = vmatpush2.msra.mxu0 0.0
    %125 = vmatprep.subr.mxu0 0.0
    %126 = vmatpush2.msra.mxu0 0.0
    %127 = vmatprep.subr.mxu0 0.0
    %128 = vmatpush2.msra.mxu0 0.0
    %129 = vmatprep.subr.mxu0 0.0
    %130 = vmatpush2.msra.mxu0 0.0
    %131 = vmatprep.subr.mxu0 0.0
    %132 = vmatpush2.msra.mxu0 0.0
    %133 = vmatprep.mubr.f32.mxu0 0.0
    %134 = vmatmul.mubr.f32.gmra.mxu0 %v64
    %v135 = vpop.f32.mrf.mxu0
    %v136 = vadd.f32 0.0, %v135
    %v137 = vpop.f32.mrf.mxu0
    %138 = vmatprep.mubr.f32.mxu0 0.0
    %139 = vmatmul.mubr.f32.gmra.mxu0 %v67
    %v140 = vpop.f32.mrf.mxu0
    %v141 = vadd.f32 0.0, %v140
    %v142 = vpop.f32.mrf.mxu0
    %143 = vdwg.mxu0
    %145 = vrot.lane.b32.xlu0 %v136, 96
    %v146 = vpop.permute.xlu0 %145
    %vm147 = vcmask 64512
    %v148 = vsel %vm147, %v136, 0
    %v150 = vsel %vm147, %v146, 0
    %152 = vmatprep.subr.mxu0 0.0
    %153 = vmatpush1.xpose.msra.mxu0 0.0
    %154 = vmatprep.subr.mxu0 0.0
    %155 = vmatpush1.xpose.msra.mxu0 0.0
    %156 = vmatprep.subr.mxu0 0.0
    %157 = vmatpush1.xpose.msra.mxu0 0.0
    %158 = vmatprep.subr.mxu0 0.0
    %159 = vmatpush1.xpose.msra.mxu0 0.0
    %160 = vmatprep.subr.mxu0 0.0
    %161 = vmatpush1.xpose.msra.mxu0 0.0
    %162 = vmatprep.subr.mxu0 0.0
    %163 = vmatpush1.xpose.msra.mxu0 0.0
    %164 = vmatprep.subr.mxu0 0.0
    %165 = vmatpush1.xpose.msra.mxu0 0.0
    %166 = vmatprep.subr.mxu0 0.0
    %167 = vmatpush1.xpose.msra.mxu0 0.0
    %168 = vmatprep.subr.mxu0 0.0
    %169 = vmatpush1.xpose.msra.mxu0 0.0
    %170 = vmatprep.subr.mxu0 0.0
    %171 = vmatpush1.xpose.msra.mxu0 0.0
    %172 = vmatprep.subr.mxu0 0.0
    %173 = vmatpush1.xpose.msra.mxu0 0.0
    %174 = vmatprep.subr.mxu0 0.0
    %175 = vmatpush1.xpose.msra.mxu0 0.0
    %176 = vmatprep.subr.mxu0 0.0
    %177 = vmatpush1.xpose.msra.mxu0 0.0
    %178 = vmatprep.subr.mxu0 0.0
    %179 = vmatpush1.xpose.msra.mxu0 0.0
    %180 = vmatprep.subr.mxu0 0.0
    %181 = vmatpush1.xpose.msra.mxu0 0.0
    %182 = vmatprep.subr.mxu0 0.0
    %183 = vmatpush1.xpose.msra.mxu0 %v150
    %184 = vmatprep.subr.mxu0 0.0
    %185 = vmatpush2.xpose.msra.mxu0 0.0
    %186 = vmatprep.subr.mxu0 0.0
    %187 = vmatpush2.xpose.msra.mxu0 0.0
    %188 = vmatprep.subr.mxu0 0.0
    %189 = vmatpush2.xpose.msra.mxu0 0.0
    %190 = vmatprep.subr.mxu0 0.0
    %191 = vmatpush2.xpose.msra.mxu0 0.0
    %192 = vmatprep.subr.mxu0 0.0
    %193 = vmatpush2.xpose.msra.mxu0 0.0
    %194 = vmatprep.subr.mxu0 0.0
    %195 = vmatpush2.xpose.msra.mxu0 0.0
    %196 = vmatprep.subr.mxu0 0.0
    %197 = vmatpush2.xpose.msra.mxu0 0.0
    %198 = vmatprep.subr.mxu0 0.0
    %199 = vmatpush2.xpose.msra.mxu0 0.0
    %200 = vmatprep.subr.mxu0 0.0
    %201 = vmatpush2.xpose.msra.mxu0 0.0
    %202 = vmatprep.subr.mxu0 0.0
    %203 = vmatpush2.xpose.msra.mxu0 0.0
    %204 = vmatprep.subr.mxu0 0.0
    %205 = vmatpush2.xpose.msra.mxu0 0.0
    %206 = vmatprep.subr.mxu0 0.0
    %207 = vmatpush2.xpose.msra.mxu0 0.0
    %208 = vmatprep.subr.mxu0 0.0
    %209 = vmatpush2.xpose.msra.mxu0 0.0
    %210 = vmatprep.subr.mxu0 0.0
    %211 = vmatpush2.xpose.msra.mxu0 0.0
    %212 = vmatprep.subr.mxu0 0.0
    %213 = vmatpush2.xpose.msra.mxu0 0.0
    %214 = vmatprep.subr.mxu0 0.0
    %215 = vmatpush2.xpose.msra.mxu0 0.0
    %216 = vmatprep.mubr.f32.mxu0 0.0
    %217 = vmatmul.mubr.f32.gmra.mxu0 %v148
    %v218 = vpop.f32.mrf.mxu0
    %v219 = vadd.f32 0.0, %v218
    %v220 = vpop.f32.mrf.mxu0
    %221 = vdwg.mxu0
    %223 = vrot.lane.b32.xlu0 %v141, 96
    %v224 = vpop.permute.xlu0 %223
    %v225 = vsel %vm147, %v141, 0
    %v227 = vsel %vm147, %v224, 0
    %229 = vmatprep.subr.mxu0 0.0
    %230 = vmatpush1.xpose.msra.mxu0 0.0
    %231 = vmatprep.subr.mxu0 0.0
    %232 = vmatpush1.xpose.msra.mxu0 0.0
    %233 = vmatprep.subr.mxu0 0.0
    %234 = vmatpush1.xpose.msra.mxu0 0.0
    %235 = vmatprep.subr.mxu0 0.0
    %236 = vmatpush1.xpose.msra.mxu0 0.0
    %237 = vmatprep.subr.mxu0 0.0
    %238 = vmatpush1.xpose.msra.mxu0 0.0
    %239 = vmatprep.subr.mxu0 0.0
    %240 = vmatpush1.xpose.msra.mxu0 0.0
    %241 = vmatprep.subr.mxu0 0.0
    %242 = vmatpush1.xpose.msra.mxu0 0.0
    %243 = vmatprep.subr.mxu0 0.0
    %244 = vmatpush1.xpose.msra.mxu0 0.0
    %245 = vmatprep.subr.mxu0 0.0
    %246 = vmatpush1.xpose.msra.mxu0 0.0
    %247 = vmatprep.subr.mxu0 0.0
    %248 = vmatpush1.xpose.msra.mxu0 0.0
    %249 = vmatprep.subr.mxu0 0.0
    %250 = vmatpush1.xpose.msra.mxu0 0.0
    %251 = vmatprep.subr.mxu0 0.0
    %252 = vmatpush1.xpose.msra.mxu0 0.0
    %253 = vmatprep.subr.mxu0 0.0
    %254 = vmatpush1.xpose.msra.mxu0 0.0
    %255 = vmatprep.subr.mxu0 0.0
    %256 = vmatpush1.xpose.msra.mxu0 0.0
    %257 = vmatprep.subr.mxu0 0.0
    %258 = vmatpush1.xpose.msra.mxu0 0.0
    %259 = vmatprep.subr.mxu0 0.0
    %260 = vmatpush1.xpose.msra.mxu0 %v227
    %261 = vmatprep.subr.mxu0 0.0
    %262 = vmatpush2.xpose.msra.mxu0 0.0
    %263 = vmatprep.subr.mxu0 0.0
    %264 = vmatpush2.xpose.msra.mxu0 0.0
    %265 = vmatprep.subr.mxu0 0.0
    %266 = vmatpush2.xpose.msra.mxu0 0.0
    %267 = vmatprep.subr.mxu0 0.0
    %268 = vmatpush2.xpose.msra.mxu0 0.0
    %269 = vmatprep.subr.mxu0 0.0
    %270 = vmatpush2.xpose.msra.mxu0 0.0
    %271 = vmatprep.subr.mxu0 0.0
    %272 = vmatpush2.xpose.msra.mxu0 0.0
    %273 = vmatprep.subr.mxu0 0.0
    %274 = vmatpush2.xpose.msra.mxu0 0.0
    %275 = vmatprep.subr.mxu0 0.0
    %276 = vmatpush2.xpose.msra.mxu0 0.0
    %277 = vmatprep.subr.mxu0 0.0
    %278 = vmatpush2.xpose.msra.mxu0 0.0
    %279 = vmatprep.subr.mxu0 0.0
    %280 = vmatpush2.xpose.msra.mxu0 0.0
    %281 = vmatprep.subr.mxu0 0.0
    %282 = vmatpush2.xpose.msra.mxu0 0.0
    %283 = vmatprep.subr.mxu0 0.0
    %284 = vmatpush2.xpose.msra.mxu0 0.0
    %285 = vmatprep.subr.mxu0 0.0
    %286 = vmatpush2.xpose.msra.mxu0 0.0
    %287 = vmatprep.subr.mxu0 0.0
    %288 = vmatpush2.xpose.msra.mxu0 0.0
    %289 = vmatprep.subr.mxu0 0.0
    %290 = vmatpush2.xpose.msra.mxu0 0.0
    %291 = vmatprep.subr.mxu0 0.0
    %292 = vmatpush2.xpose.msra.mxu0 0.0
    %293 = vmatprep.mubr.f32.mxu0 0.0
    %294 = vmatmul.mubr.f32.gmra.mxu0 %v225
    %v295 = vpop.f32.mrf.mxu0
    %v296 = vadd.f32 0.0, %v295
    %v297 = vpop.f32.mrf.mxu0
    %298 = vdwg.mxu0
    %v299 = vsel %vm147, %v219, -inf
    %300 = vmax.xlane.f32.xlu0 %v299
    %v301 = vpop.xlane.xlu0 %300
    %v302 = vsel %vm147, %v296, -inf
    %303 = vmax.xlane.f32.xlu0 %v302
    %v304 = vpop.xlane.xlu0 %303
    %v305 = vsub.f32 %v219, %v301
    %v306 = vsub.f32 %v296, %v304
    %v307 = vmul.f32 %v305, 1.442695
    %v308 = vpow.pop %v307
    %v309 = vmul.f32 %v306, 1.442695
    %v310 = vpow.pop %v309
    %v311 = vsel %vm147, %v308, 0.0
    %312 = vadd.xlane.f32.xlu0 %v311
    %v313 = vpop.xlane.xlu0 %312
    %v314 = vsel %vm147, %v310, 0.0
    %315 = vadd.xlane.f32.xlu0 %v314
    %v316 = vpop.xlane.xlu0 %315
    %v317 = vrcp.pop %v313
    %v318 = vrcp.pop %v316
    %v319 = vmul.f32 %v308, %v317
    %v320 = vmul.f32 %v310, %v318
    %321 = vrot.lane.b32.xlu0 %v136, 64
    %v322 = vpop.permute.xlu0 %321
    %v325 = vsel %vm147, %v319, 0
    %327 = vmatprep.subr.mxu0 0.0
    %328 = vmatpush1.msra.mxu0 0.0
    %329 = vmatprep.subr.mxu0 0.0
    %330 = vmatpush1.msra.mxu0 0.0
    %331 = vmatprep.subr.mxu0 0.0
    %332 = vmatpush1.msra.mxu0 0.0
    %333 = vmatprep.subr.mxu0 0.0
    %334 = vmatpush1.msra.mxu0 0.0
    %335 = vmatprep.subr.mxu0 0.0
    %336 = vmatpush1.msra.mxu0 0.0
    %337 = vmatprep.subr.mxu0 0.0
    %338 = vmatpush1.msra.mxu0 0.0
    %339 = vmatprep.subr.mxu0 0.0
    %340 = vmatpush1.msra.mxu0 0.0
    %341 = vmatprep.subr.mxu0 0.0
    %342 = vmatpush1.msra.mxu0 0.0
    %343 = vmatprep.subr.mxu0 0.0
    %344 = vmatpush1.msra.mxu0 0.0
    %345 = vmatprep.subr.mxu0 0.0
    %346 = vmatpush1.msra.mxu0 0.0
    %347 = vmatprep.subr.mxu0 0.0
    %348 = vmatpush1.msra.mxu0 0.0
    %349 = vmatprep.subr.mxu0 0.0
    %350 = vmatpush1.msra.mxu0 0.0
    %351 = vmatprep.subr.mxu0 0.0
    %352 = vmatpush1.msra.mxu0 0.0
    %353 = vmatprep.subr.mxu0 0.0
    %354 = vmatpush1.msra.mxu0 0.0
    %355 = vmatprep.subr.mxu0 0.0
    %356 = vmatpush1.msra.mxu0 0.0
    %357 = vmatprep.subr.mxu0 0.0
    %358 = vmatpush1.msra.mxu0 %v322
    %359 = vmatprep.subr.mxu0 0.0
    %360 = vmatpush2.msra.mxu0 0.0
    %361 = vmatprep.subr.mxu0 0.0
    %362 = vmatpush2.msra.mxu0 0.0
    %363 = vmatprep.subr.mxu0 0.0
    %364 = vmatpush2.msra.mxu0 0.0
    %365 = vmatprep.subr.mxu0 0.0
    %366 = vmatpush2.msra.mxu0 0.0
    %367 = vmatprep.subr.mxu0 0.0
    %368 = vmatpush2.msra.mxu0 0.0
    %369 = vmatprep.subr.mxu0 0.0
    %370 = vmatpush2.msra.mxu0 0.0
    %371 = vmatprep.subr.mxu0 0.0
    %372 = vmatpush2.msra.mxu0 0.0
    %373 = vmatprep.subr.mxu0 0.0
    %374 = vmatpush2.msra.mxu0 0.0
    %375 = vmatprep.subr.mxu0 0.0
    %376 = vmatpush2.msra.mxu0 0.0
    %377 = vmatprep.subr.mxu0 0.0
    %378 = vmatpush2.msra.mxu0 0.0
    %379 = vmatprep.subr.mxu0 0.0
    %380 = vmatpush2.msra.mxu0 0.0
    %381 = vmatprep.subr.mxu0 0.0
    %382 = vmatpush2.msra.mxu0 0.0
    %383 = vmatprep.subr.mxu0 0.0
    %384 = vmatpush2.msra.mxu0 0.0
    %385 = vmatprep.subr.mxu0 0.0
    %386 = vmatpush2.msra.mxu0 0.0
    %387 = vmatprep.subr.mxu0 0.0
    %388 = vmatpush2.msra.mxu0 0.0
    %389 = vmatprep.subr.mxu0 0.0
    %390 = vmatpush2.msra.mxu0 0.0
    %391 = vmatprep.mubr.f32.mxu0 0.0
    %392 = vmatmul.mubr.f32.gmra.mxu0 %v325
    %v393 = vpop.f32.mrf.mxu0
    %v394 = vadd.f32 0.0, %v393
    %v395 = vpop.f32.mrf.mxu0
    %396 = vdwg.mxu0
    %397 = vrot.lane.b32.xlu0 %v141, 64
    %v398 = vpop.permute.xlu0 %397
    %v401 = vsel %vm147, %v320, 0
    %403 = vmatprep.subr.mxu0 0.0
    %404 = vmatpush1.msra.mxu0 0.0
    %405 = vmatprep.subr.mxu0 0.0
    %406 = vmatpush1.msra.mxu0 0.0
    %407 = vmatprep.subr.mxu0 0.0
    %408 = vmatpush1.msra.mxu0 0.0
    %409 = vmatprep.subr.mxu0 0.0
    %410 = vmatpush1.msra.mxu0 0.0
    %411 = vmatprep.subr.mxu0 0.0
    %412 = vmatpush1.msra.mxu0 0.0
    %413 = vmatprep.subr.mxu0 0.0
    %414 = vmatpush1.msra.mxu0 0.0
    %415 = vmatprep.subr.mxu0 0.0
    %416 = vmatpush1.msra.mxu0 0.0
    %417 = vmatprep.subr.mxu0 0.0
    %418 = vmatpush1.msra.mxu0 0.0
    %419 = vmatprep.subr.mxu0 0.0
    %420 = vmatpush1.msra.mxu0 0.0
    %421 = vmatprep.subr.mxu0 0.0
    %422 = vmatpush1.msra.mxu0 0.0
    %423 = vmatprep.subr.mxu0 0.0
    %424 = vmatpush1.msra.mxu0 0.0
    %425 = vmatprep.subr.mxu0 0.0
    %426 = vmatpush1.msra.mxu0 0.0
    %427 = vmatprep.subr.mxu0 0.0
    %428 = vmatpush1.msra.mxu0 0.0
    %429 = vmatprep.subr.mxu0 0.0
    %430 = vmatpush1.msra.mxu0 0.0
    %431 = vmatprep.subr.mxu0 0.0
    %432 = vmatpush1.msra.mxu0 0.0
    %433 = vmatprep.subr.mxu0 0.0
    %434 = vmatpush1.msra.mxu0 %v398
    %435 = vmatprep.subr.mxu0 0.0
    %436 = vmatpush2.msra.mxu0 0.0
    %437 = vmatprep.subr.mxu0 0.0
    %438 = vmatpush2.msra.mxu0 0.0
    %439 = vmatprep.subr.mxu0 0.0
    %440 = vmatpush2.msra.mxu0 0.0
    %441 = vmatprep.subr.mxu0 0.0
    %442 = vmatpush2.msra.mxu0 0.0
    %443 = vmatprep.subr.mxu0 0.0
    %444 = vmatpush2.msra.mxu0 0.0
    %445 = vmatprep.subr.mxu0 0.0
    %446 = vmatpush2.msra.mxu0 0.0
    %447 = vmatprep.subr.mxu0 0.0
    %448 = vmatpush2.msra.mxu0 0.0
    %449 = vmatprep.subr.mxu0 0.0
    %450 = vmatpush2.msra.mxu0 0.0
    %451 = vmatprep.subr.mxu0 0.0
    %452 = vmatpush2.msra.mxu0 0.0
    %453 = vmatprep.subr.mxu0 0.0
    %454 = vmatpush2.msra.mxu0 0.0
    %455 = vmatprep.subr.mxu0 0.0
    %456 = vmatpush2.msra.mxu0 0.0
    %457 = vmatprep.subr.mxu0 0.0
    %458 = vmatpush2.msra.mxu0 0.0
    %459 = vmatprep.subr.mxu0 0.0
    %460 = vmatpush2.msra.mxu0 0.0
    %461 = vmatprep.subr.mxu0 0.0
    %462 = vmatpush2.msra.mxu0 0.0
    %463 = vmatprep.subr.mxu0 0.0
    %464 = vmatpush2.msra.mxu0 0.0
    %465 = vmatprep.subr.mxu0 0.0
    %466 = vmatpush2.msra.mxu0 0.0
    %467 = vmatprep.mubr.f32.mxu0 0.0
    %468 = vmatmul.mubr.f32.gmra.mxu0 %v401
    %v469 = vpop.f32.mrf.mxu0
    %v470 = vadd.f32 0.0, %v469
    %v471 = vpop.f32.mrf.mxu0
    %472 = vdwg.mxu0
    %473 = vrot.lane.b32.xlu0 %v136, 120
    %v474 = vpop.permute.xlu0 %473
    %475 = vrot.lane.b32.xlu0 %v136, 88
    %v476 = vpop.permute.xlu0 %475
    %v477 = vsel %vm147, %v474, 0
    %v479 = vsel %vm147, %v476, 0
    %481 = vmatprep.subr.mxu0 0.0
    %482 = vmatpush1.xpose.msra.mxu0 0.0
    %483 = vmatprep.subr.mxu0 0.0
    %484 = vmatpush1.xpose.msra.mxu0 0.0
    %485 = vmatprep.subr.mxu0 0.0
    %486 = vmatpush1.xpose.msra.mxu0 0.0
    %487 = vmatprep.subr.mxu0 0.0
    %488 = vmatpush1.xpose.msra.mxu0 0.0
    %489 = vmatprep.subr.mxu0 0.0
    %490 = vmatpush1.xpose.msra.mxu0 0.0
    %491 = vmatprep.subr.mxu0 0.0
    %492 = vmatpush1.xpose.msra.mxu0 0.0
    %493 = vmatprep.subr.mxu0 0.0
    %494 = vmatpush1.xpose.msra.mxu0 0.0
    %495 = vmatprep.subr.mxu0 0.0
    %496 = vmatpush1.xpose.msra.mxu0 0.0
    %497 = vmatprep.subr.mxu0 0.0
    %498 = vmatpush1.xpose.msra.mxu0 0.0
    %499 = vmatprep.subr.mxu0 0.0
    %500 = vmatpush1.xpose.msra.mxu0 0.0
    %501 = vmatprep.subr.mxu0 0.0
    %502 = vmatpush1.xpose.msra.mxu0 0.0
    %503 = vmatprep.subr.mxu0 0.0
    %504 = vmatpush1.xpose.msra.mxu0 0.0
    %505 = vmatprep.subr.mxu0 0.0
    %506 = vmatpush1.xpose.msra.mxu0 0.0
    %507 = vmatprep.subr.mxu0 0.0
    %508 = vmatpush1.xpose.msra.mxu0 0.0
    %509 = vmatprep.subr.mxu0 0.0
    %510 = vmatpush1.xpose.msra.mxu0 0.0
    %511 = vmatprep.subr.mxu0 0.0
    %512 = vmatpush1.xpose.msra.mxu0 %v479
    %513 = vmatprep.subr.mxu0 0.0
    %514 = vmatpush2.xpose.msra.mxu0 0.0
    %515 = vmatprep.subr.mxu0 0.0
    %516 = vmatpush2.xpose.msra.mxu0 0.0
    %517 = vmatprep.subr.mxu0 0.0
    %518 = vmatpush2.xpose.msra.mxu0 0.0
    %519 = vmatprep.subr.mxu0 0.0
    %520 = vmatpush2.xpose.msra.mxu0 0.0
    %521 = vmatprep.subr.mxu0 0.0
    %522 = vmatpush2.xpose.msra.mxu0 0.0
    %523 = vmatprep.subr.mxu0 0.0
    %524 = vmatpush2.xpose.msra.mxu0 0.0
    %525 = vmatprep.subr.mxu0 0.0
    %526 = vmatpush2.xpose.msra.mxu0 0.0
    %527 = vmatprep.subr.mxu0 0.0
    %528 = vmatpush2.xpose.msra.mxu0 0.0
    %529 = vmatprep.subr.mxu0 0.0
    %530 = vmatpush2.xpose.msra.mxu0 0.0
    %531 = vmatprep.subr.mxu0 0.0
    %532 = vmatpush2.xpose.msra.mxu0 0.0
    %533 = vmatprep.subr.mxu0 0.0
    %534 = vmatpush2.xpose.msra.mxu0 0.0
    %535 = vmatprep.subr.mxu0 0.0
    %536 = vmatpush2.xpose.msra.mxu0 0.0
    %537 = vmatprep.subr.mxu0 0.0
    %538 = vmatpush2.xpose.msra.mxu0 0.0
    %539 = vmatprep.subr.mxu0 0.0
    %540 = vmatpush2.xpose.msra.mxu0 0.0
    %541 = vmatprep.subr.mxu0 0.0
    %542 = vmatpush2.xpose.msra.mxu0 0.0
    %543 = vmatprep.subr.mxu0 0.0
    %544 = vmatpush2.xpose.msra.mxu0 0.0
    %545 = vmatprep.mubr.f32.mxu0 0.0
    %546 = vmatmul.mubr.f32.gmra.mxu0 %v477
    %v547 = vpop.f32.mrf.mxu0
    %v548 = vadd.f32 0.0, %v547
    %v549 = vpop.f32.mrf.mxu0
    %550 = vdwg.mxu0
    %551 = vrot.lane.b32.xlu0 %v141, 120
    %v552 = vpop.permute.xlu0 %551
    %553 = vrot.lane.b32.xlu0 %v141, 88
    %v554 = vpop.permute.xlu0 %553
    %v555 = vsel %vm147, %v552, 0
    %v557 = vsel %vm147, %v554, 0
    %559 = vmatprep.subr.mxu0 0.0
    %560 = vmatpush1.xpose.msra.mxu0 0.0
    %561 = vmatprep.subr.mxu0 0.0
    %562 = vmatpush1.xpose.msra.mxu0 0.0
    %563 = vmatprep.subr.mxu0 0.0
    %564 = vmatpush1.xpose.msra.mxu0 0.0
    %565 = vmatprep.subr.mxu0 0.0
    %566 = vmatpush1.xpose.msra.mxu0 0.0
    %567 = vmatprep.subr.mxu0 0.0
    %568 = vmatpush1.xpose.msra.mxu0 0.0
    %569 = vmatprep.subr.mxu0 0.0
    %570 = vmatpush1.xpose.msra.mxu0 0.0
    %571 = vmatprep.subr.mxu0 0.0
    %572 = vmatpush1.xpose.msra.mxu0 0.0
    %573 = vmatprep.subr.mxu0 0.0
    %574 = vmatpush1.xpose.msra.mxu0 0.0
    %575 = vmatprep.subr.mxu0 0.0
    %576 = vmatpush1.xpose.msra.mxu0 0.0
    %577 = vmatprep.subr.mxu0 0.0
    %578 = vmatpush1.xpose.msra.mxu0 0.0
    %579 = vmatprep.subr.mxu0 0.0
    %580 = vmatpush1.xpose.msra.mxu0 0.0
    %581 = vmatprep.subr.mxu0 0.0
    %582 = vmatpush1.xpose.msra.mxu0 0.0
    %583 = vmatprep.subr.mxu0 0.0
    %584 = vmatpush1.xpose.msra.mxu0 0.0
    %585 = vmatprep.subr.mxu0 0.0
    %586 = vmatpush1.xpose.msra.mxu0 0.0
    %587 = vmatprep.subr.mxu0 0.0
    %588 = vmatpush1.xpose.msra.mxu0 0.0
    %589 = vmatprep.subr.mxu0 0.0
    %590 = vmatpush1.xpose.msra.mxu0 %v557
    %591 = vmatprep.subr.mxu0 0.0
    %592 = vmatpush2.xpose.msra.mxu0 0.0
    %593 = vmatprep.subr.mxu0 0.0
    %594 = vmatpush2.xpose.msra.mxu0 0.0
    %595 = vmatprep.subr.mxu0 0.0
    %596 = vmatpush2.xpose.msra.mxu0 0.0
    %597 = vmatprep.subr.mxu0 0.0
    %598 = vmatpush2.xpose.msra.mxu0 0.0
    %599 = vmatprep.subr.mxu0 0.0
    %600 = vmatpush2.xpose.msra.mxu0 0.0
    %601 = vmatprep.subr.mxu0 0.0
    %602 = vmatpush2.xpose.msra.mxu0 0.0
    %603 = vmatprep.subr.mxu0 0.0
    %604 = vmatpush2.xpose.msra.mxu0 0.0
    %605 = vmatprep.subr.mxu0 0.0
    %606 = vmatpush2.xpose.msra.mxu0 0.0
    %607 = vmatprep.subr.mxu0 0.0
    %608 = vmatpush2.xpose.msra.mxu0 0.0
    %609 = vmatprep.subr.mxu0 0.0
    %610 = vmatpush2.xpose.msra.mxu0 0.0
    %611 = vmatprep.subr.mxu0 0.0
    %612 = vmatpush2.xpose.msra.mxu0 0.0
    %613 = vmatprep.subr.mxu0 0.0
    %614 = vmatpush2.xpose.msra.mxu0 0.0
    %615 = vmatprep.subr.mxu0 0.0
    %616 = vmatpush2.xpose.msra.mxu0 0.0
    %617 = vmatprep.subr.mxu0 0.0
    %618 = vmatpush2.xpose.msra.mxu0 0.0
    %619 = vmatprep.subr.mxu0 0.0
    %620 = vmatpush2.xpose.msra.mxu0 0.0
    %621 = vmatprep.subr.mxu0 0.0
    %622 = vmatpush2.xpose.msra.mxu0 0.0
    %623 = vmatprep.mubr.f32.mxu0 0.0
    %624 = vmatmul.mubr.f32.gmra.mxu0 %v555
    %v625 = vpop.f32.mrf.mxu0
    %v626 = vadd.f32 0.0, %v625
    %v627 = vpop.f32.mrf.mxu0
    %628 = vdwg.mxu0
    %v629 = vsel %vm147, %v548, -inf
    %630 = vmax.xlane.f32.xlu0 %v629
    %v631 = vpop.xlane.xlu0 %630
    %v632 = vsel %vm147, %v626, -inf
    %633 = vmax.xlane.f32.xlu0 %v632
    %v634 = vpop.xlane.xlu0 %633
    %v635 = vsub.f32 %v548, %v631
    %v636 = vsub.f32 %v626, %v634
    %v637 = vmul.f32 %v635, 1.442695
    %v638 = vpow.pop %v637
    %v639 = vmul.f32 %v636, 1.442695
    %v640 = vpow.pop %v639
    %v641 = vsel %vm147, %v638, 0.0
    %642 = vadd.xlane.f32.xlu0 %v641
    %v643 = vpop.xlane.xlu0 %642
    %v644 = vsel %vm147, %v640, 0.0
    %645 = vadd.xlane.f32.xlu0 %v644
    %v646 = vpop.xlane.xlu0 %645
    %v647 = vrcp.pop %v643
    %v648 = vrcp.pop %v646
    %v649 = vmul.f32 %v638, %v647
    %v650 = vmul.f32 %v640, %v648
    %651 = vrot.lane.b32.xlu0 %v136, 56
    %v652 = vpop.permute.xlu0 %651
    %v655 = vsel %vm147, %v649, 0
    %657 = vmatprep.subr.mxu0 0.0
    %658 = vmatpush1.msra.mxu0 0.0
    %659 = vmatprep.subr.mxu0 0.0
    %660 = vmatpush1.msra.mxu0 0.0
    %661 = vmatprep.subr.mxu0 0.0
    %662 = vmatpush1.msra.mxu0 0.0
    %663 = vmatprep.subr.mxu0 0.0
    %664 = vmatpush1.msra.mxu0 0.0
    %665 = vmatprep.subr.mxu0 0.0
    %666 = vmatpush1.msra.mxu0 0.0
    %667 = vmatprep.subr.mxu0 0.0
    %668 = vmatpush1.msra.mxu0 0.0
    %669 = vmatprep.subr.mxu0 0.0
    %670 = vmatpush1.msra.mxu0 0.0
    %671 = vmatprep.subr.mxu0 0.0
    %672 = vmatpush1.msra.mxu0 0.0
    %673 = vmatprep.subr.mxu0 0.0
    %674 = vmatpush1.msra.mxu0 0.0
    %675 = vmatprep.subr.mxu0 0.0
    %676 = vmatpush1.msra.mxu0 0.0
    %677 = vmatprep.subr.mxu0 0.0
    %678 = vmatpush1.msra.mxu0 0.0
    %679 = vmatprep.subr.mxu0 0.0
    %680 = vmatpush1.msra.mxu0 0.0
    %681 = vmatprep.subr.mxu0 0.0
    %682 = vmatpush1.msra.mxu0 0.0
    %683 = vmatprep.subr.mxu0 0.0
    %684 = vmatpush1.msra.mxu0 0.0
    %685 = vmatprep.subr.mxu0 0.0
    %686 = vmatpush1.msra.mxu0 0.0
    %687 = vmatprep.subr.mxu0 0.0
    %688 = vmatpush1.msra.mxu0 %v652
    %689 = vmatprep.subr.mxu0 0.0
    %690 = vmatpush2.msra.mxu0 0.0
    %691 = vmatprep.subr.mxu0 0.0
    %692 = vmatpush2.msra.mxu0 0.0
    %693 = vmatprep.subr.mxu0 0.0
    %694 = vmatpush2.msra.mxu0 0.0
    %695 = vmatprep.subr.mxu0 0.0
    %696 = vmatpush2.msra.mxu0 0.0
    %697 = vmatprep.subr.mxu0 0.0
    %698 = vmatpush2.msra.mxu0 0.0
    %699 = vmatprep.subr.mxu0 0.0
    %700 = vmatpush2.msra.mxu0 0.0
    %701 = vmatprep.subr.mxu0 0.0
    %702 = vmatpush2.msra.mxu0 0.0
    %703 = vmatprep.subr.mxu0 0.0
    %704 = vmatpush2.msra.mxu0 0.0
    %705 = vmatprep.subr.mxu0 0.0
    %706 = vmatpush2.msra.mxu0 0.0
    %707 = vmatprep.subr.mxu0 0.0
    %708 = vmatpush2.msra.mxu0 0.0
    %709 = vmatprep.subr.mxu0 0.0
    %710 = vmatpush2.msra.mxu0 0.0
    %711 = vmatprep.subr.mxu0 0.0
    %712 = vmatpush2.msra.mxu0 0.0
    %713 = vmatprep.subr.mxu0 0.0
    %714 = vmatpush2.msra.mxu0 0.0
    %715 = vmatprep.subr.mxu0 0.0
    %716 = vmatpush2.msra.mxu0 0.0
    %717 = vmatprep.subr.mxu0 0.0
    %718 = vmatpush2.msra.mxu0 0.0
    %719 = vmatprep.subr.mxu0 0.0
    %720 = vmatpush2.msra.mxu0 0.0
    %721 = vmatprep.mubr.f32.mxu0 0.0
    %722 = vmatmul.mubr.f32.gmra.mxu0 %v655
    %v723 = vpop.f32.mrf.mxu0
    %v724 = vadd.f32 0.0, %v723
    %v725 = vpop.f32.mrf.mxu0
    %726 = vdwg.mxu0
    %727 = vrot.lane.b32.xlu0 %v141, 56
    %v728 = vpop.permute.xlu0 %727
    %v731 = vsel %vm147, %v650, 0
    %733 = vmatprep.subr.mxu0 0.0
    %734 = vmatpush1.msra.mxu0 0.0
    %735 = vmatprep.subr.mxu0 0.0
    %736 = vmatpush1.msra.mxu0 0.0
    %737 = vmatprep.subr.mxu0 0.0
    %738 = vmatpush1.msra.mxu0 0.0
    %739 = vmatprep.subr.mxu0 0.0
    %740 = vmatpush1.msra.mxu0 0.0
    %741 = vmatprep.subr.mxu0 0.0
    %742 = vmatpush1.msra.mxu0 0.0
    %743 = vmatprep.subr.mxu0 0.0
    %744 = vmatpush1.msra.mxu0 0.0
    %745 = vmatprep.subr.mxu0 0.0
    %746 = vmatpush1.msra.mxu0 0.0
    %747 = vmatprep.subr.mxu0 0.0
    %748 = vmatpush1.msra.mxu0 0.0
    %749 = vmatprep.subr.mxu0 0.0
    %750 = vmatpush1.msra.mxu0 0.0
    %751 = vmatprep.subr.mxu0 0.0
    %752 = vmatpush1.msra.mxu0 0.0
    %753 = vmatprep.subr.mxu0 0.0
    %754 = vmatpush1.msra.mxu0 0.0
    %755 = vmatprep.subr.mxu0 0.0
    %756 = vmatpush1.msra.mxu0 0.0
    %757 = vmatprep.subr.mxu0 0.0
    %758 = vmatpush1.msra.mxu0 0.0
    %759 = vmatprep.subr.mxu0 0.0
    %760 = vmatpush1.msra.mxu0 0.0
    %761 = vmatprep.subr.mxu0 0.0
    %762 = vmatpush1.msra.mxu0 0.0
    %763 = vmatprep.subr.mxu0 0.0
    %764 = vmatpush1.msra.mxu0 %v728
    %765 = vmatprep.subr.mxu0 0.0
    %766 = vmatpush2.msra.mxu0 0.0
    %767 = vmatprep.subr.mxu0 0.0
    %768 = vmatpush2.msra.mxu0 0.0
    %769 = vmatprep.subr.mxu0 0.0
    %770 = vmatpush2.msra.mxu0 0.0
    %771 = vmatprep.subr.mxu0 0.0
    %772 = vmatpush2.msra.mxu0 0.0
    %773 = vmatprep.subr.mxu0 0.0
    %774 = vmatpush2.msra.mxu0 0.0
    %775 = vmatprep.subr.mxu0 0.0
    %776 = vmatpush2.msra.mxu0 0.0
    %777 = vmatprep.subr.mxu0 0.0
    %778 = vmatpush2.msra.mxu0 0.0
    %779 = vmatprep.subr.mxu0 0.0
    %780 = vmatpush2.msra.mxu0 0.0
    %781 = vmatprep.subr.mxu0 0.0
    %782 = vmatpush2.msra.mxu0 0.0
    %783 = vmatprep.subr.mxu0 0.0
    %784 = vmatpush2.msra.mxu0 0.0
    %785 = vmatprep.subr.mxu0 0.0
    %786 = vmatpush2.msra.mxu0 0.0
    %787 = vmatprep.subr.mxu0 0.0
    %788 = vmatpush2.msra.mxu0 0.0
    %789 = vmatprep.subr.mxu0 0.0
    %790 = vmatpush2.msra.mxu0 0.0
    %791 = vmatprep.subr.mxu0 0.0
    %792 = vmatpush2.msra.mxu0 0.0
    %793 = vmatprep.subr.mxu0 0.0
    %794 = vmatpush2.msra.mxu0 0.0
    %795 = vmatprep.subr.mxu0 0.0
    %796 = vmatpush2.msra.mxu0 0.0
    %797 = vmatprep.mubr.f32.mxu0 0.0
    %798 = vmatmul.mubr.f32.gmra.mxu0 %v731
    %v799 = vpop.f32.mrf.mxu0
    %v800 = vadd.f32 0.0, %v799
    %v801 = vpop.f32.mrf.mxu0
    %802 = vdwg.mxu0
    %803 = vrot.lane.b32.xlu0 %v136, 112
    %v804 = vpop.permute.xlu0 %803
    %805 = vrot.lane.b32.xlu0 %v136, 80
    %v806 = vpop.permute.xlu0 %805
    %v807 = vsel %vm147, %v804, 0
    %v809 = vsel %vm147, %v806, 0
    %811 = vmatprep.subr.mxu0 0.0
    %812 = vmatpush1.xpose.msra.mxu0 0.0
    %813 = vmatprep.subr.mxu0 0.0
    %814 = vmatpush1.xpose.msra.mxu0 0.0
    %815 = vmatprep.subr.mxu0 0.0
    %816 = vmatpush1.xpose.msra.mxu0 0.0
    %817 = vmatprep.subr.mxu0 0.0
    %818 = vmatpush1.xpose.msra.mxu0 0.0
    %819 = vmatprep.subr.mxu0 0.0
    %820 = vmatpush1.xpose.msra.mxu0 0.0
    %821 = vmatprep.subr.mxu0 0.0
    %822 = vmatpush1.xpose.msra.mxu0 0.0
    %823 = vmatprep.subr.mxu0 0.0
    %824 = vmatpush1.xpose.msra.mxu0 0.0
    %825 = vmatprep.subr.mxu0 0.0
    %826 = vmatpush1.xpose.msra.mxu0 0.0
    %827 = vmatprep.subr.mxu0 0.0
    %828 = vmatpush1.xpose.msra.mxu0 0.0
    %829 = vmatprep.subr.mxu0 0.0
    %830 = vmatpush1.xpose.msra.mxu0 0.0
    %831 = vmatprep.subr.mxu0 0.0
    %832 = vmatpush1.xpose.msra.mxu0 0.0
    %833 = vmatprep.subr.mxu0 0.0
    %834 = vmatpush1.xpose.msra.mxu0 0.0
    %835 = vmatprep.subr.mxu0 0.0
    %836 = vmatpush1.xpose.msra.mxu0 0.0
    %837 = vmatprep.subr.mxu0 0.0
    %838 = vmatpush1.xpose.msra.mxu0 0.0
    %839 = vmatprep.subr.mxu0 0.0
    %840 = vmatpush1.xpose.msra.mxu0 0.0
    %841 = vmatprep.subr.mxu0 0.0
    %842 = vmatpush1.xpose.msra.mxu0 %v809
    %843 = vmatprep.subr.mxu0 0.0
    %844 = vmatpush2.xpose.msra.mxu0 0.0
    %845 = vmatprep.subr.mxu0 0.0
    %846 = vmatpush2.xpose.msra.mxu0 0.0
    %847 = vmatprep.subr.mxu0 0.0
    %848 = vmatpush2.xpose.msra.mxu0 0.0
    %849 = vmatprep.subr.mxu0 0.0
    %850 = vmatpush2.xpose.msra.mxu0 0.0
    %851 = vmatprep.subr.mxu0 0.0
    %852 = vmatpush2.xpose.msra.mxu0 0.0
    %853 = vmatprep.subr.mxu0 0.0
    %854 = vmatpush2.xpose.msra.mxu0 0.0
    %855 = vmatprep.subr.mxu0 0.0
    %856 = vmatpush2.xpose.msra.mxu0 0.0
    %857 = vmatprep.subr.mxu0 0.0
    %858 = vmatpush2.xpose.msra.mxu0 0.0
    %859 = vmatprep.subr.mxu0 0.0
    %860 = vmatpush2.xpose.msra.mxu0 0.0
    %861 = vmatprep.subr.mxu0 0.0
    %862 = vmatpush2.xpose.msra.mxu0 0.0
    %863 = vmatprep.subr.mxu0 0.0
    %864 = vmatpush2.xpose.msra.mxu0 0.0
    %865 = vmatprep.subr.mxu0 0.0
    %866 = vmatpush2.xpose.msra.mxu0 0.0
    %867 = vmatprep.subr.mxu0 0.0
    %868 = vmatpush2.xpose.msra.mxu0 0.0
    %869 = vmatprep.subr.mxu0 0.0
    %870 = vmatpush2.xpose.msra.mxu0 0.0
    %871 = vmatprep.subr.mxu0 0.0
    %872 = vmatpush2.xpose.msra.mxu0 0.0
    %873 = vmatprep.subr.mxu0 0.0
    %874 = vmatpush2.xpose.msra.mxu0 0.0
    %875 = vmatprep.mubr.f32.mxu0 0.0
    %876 = vmatmul.mubr.f32.gmra.mxu0 %v807
    %v877 = vpop.f32.mrf.mxu0
    %v878 = vadd.f32 0.0, %v877
    %v879 = vpop.f32.mrf.mxu0
    %880 = vdwg.mxu0
    %881 = vrot.lane.b32.xlu0 %v141, 112
    %v882 = vpop.permute.xlu0 %881
    %883 = vrot.lane.b32.xlu0 %v141, 80
    %v884 = vpop.permute.xlu0 %883
    %v885 = vsel %vm147, %v882, 0
    %v887 = vsel %vm147, %v884, 0
    %889 = vmatprep.subr.mxu0 0.0
    %890 = vmatpush1.xpose.msra.mxu0 0.0
    %891 = vmatprep.subr.mxu0 0.0
    %892 = vmatpush1.xpose.msra.mxu0 0.0
    %893 = vmatprep.subr.mxu0 0.0
    %894 = vmatpush1.xpose.msra.mxu0 0.0
    %895 = vmatprep.subr.mxu0 0.0
    %896 = vmatpush1.xpose.msra.mxu0 0.0
    %897 = vmatprep.subr.mxu0 0.0
    %898 = vmatpush1.xpose.msra.mxu0 0.0
    %899 = vmatprep.subr.mxu0 0.0
    %900 = vmatpush1.xpose.msra.mxu0 0.0
    %901 = vmatprep.subr.mxu0 0.0
    %902 = vmatpush1.xpose.msra.mxu0 0.0
    %903 = vmatprep.subr.mxu0 0.0
    %904 = vmatpush1.xpose.msra.mxu0 0.0
    %905 = vmatprep.subr.mxu0 0.0
    %906 = vmatpush1.xpose.msra.mxu0 0.0
    %907 = vmatprep.subr.mxu0 0.0
    %908 = vmatpush1.xpose.msra.mxu0 0.0
    %909 = vmatprep.subr.mxu0 0.0
    %910 = vmatpush1.xpose.msra.mxu0 0.0
    %911 = vmatprep.subr.mxu0 0.0
    %912 = vmatpush1.xpose.msra.mxu0 0.0
    %913 = vmatprep.subr.mxu0 0.0
    %914 = vmatpush1.xpose.msra.mxu0 0.0
    %915 = vmatprep.subr.mxu0 0.0
    %916 = vmatpush1.xpose.msra.mxu0 0.0
    %917 = vmatprep.subr.mxu0 0.0
    %918 = vmatpush1.xpose.msra.mxu0 0.0
    %919 = vmatprep.subr.mxu0 0.0
    %920 = vmatpush1.xpose.msra.mxu0 %v887
    %921 = vmatprep.subr.mxu0 0.0
    %922 = vmatpush2.xpose.msra.mxu0 0.0
    %923 = vmatprep.subr.mxu0 0.0
    %924 = vmatpush2.xpose.msra.mxu0 0.0
    %925 = vmatprep.subr.mxu0 0.0
    %926 = vmatpush2.xpose.msra.mxu0 0.0
    %927 = vmatprep.subr.mxu0 0.0
    %928 = vmatpush2.xpose.msra.mxu0 0.0
    %929 = vmatprep.subr.mxu0 0.0
    %930 = vmatpush2.xpose.msra.mxu0 0.0
    %931 = vmatprep.subr.mxu0 0.0
    %932 = vmatpush2.xpose.msra.mxu0 0.0
    %933 = vmatprep.subr.mxu0 0.0
    %934 = vmatpush2.xpose.msra.mxu0 0.0
    %935 = vmatprep.subr.mxu0 0.0
    %936 = vmatpush2.xpose.msra.mxu0 0.0
    %937 = vmatprep.subr.mxu0 0.0
    %938 = vmatpush2.xpose.msra.mxu0 0.0
    %939 = vmatprep.subr.mxu0 0.0
    %940 = vmatpush2.xpose.msra.mxu0 0.0
    %941 = vmatprep.subr.mxu0 0.0
    %942 = vmatpush2.xpose.msra.mxu0 0.0
    %943 = vmatprep.subr.mxu0 0.0
    %944 = vmatpush2.xpose.msra.mxu0 0.0
    %945 = vmatprep.subr.mxu0 0.0
    %946 = vmatpush2.xpose.msra.mxu0 0.0
    %947 = vmatprep.subr.mxu0 0.0
    %948 = vmatpush2.xpose.msra.mxu0 0.0
    %949 = vmatprep.subr.mxu0 0.0
    %950 = vmatpush2.xpose.msra.mxu0 0.0
    %951 = vmatprep.subr.mxu0 0.0
    %952 = vmatpush2.xpose.msra.mxu0 0.0
    %953 = vmatprep.mubr.f32.mxu0 0.0
    %954 = vmatmul.mubr.f32.gmra.mxu0 %v885
    %v955 = vpop.f32.mrf.mxu0
    %v956 = vadd.f32 0.0, %v955
    %v957 = vpop.f32.mrf.mxu0
    %958 = vdwg.mxu0
    %v959 = vsel %vm147, %v878, -inf
    %960 = vmax.xlane.f32.xlu0 %v959
    %v961 = vpop.xlane.xlu0 %960
    %v962 = vsel %vm147, %v956, -inf
    %963 = vmax.xlane.f32.xlu0 %v962
    %v964 = vpop.xlane.xlu0 %963
    %v965 = vsub.f32 %v878, %v961
    %v966 = vsub.f32 %v956, %v964
    %v967 = vmul.f32 %v965, 1.442695
    %v968 = vpow.pop %v967
    %v969 = vmul.f32 %v966, 1.442695
    %v970 = vpow.pop %v969
    %v971 = vsel %vm147, %v968, 0.0
    %972 = vadd.xlane.f32.xlu0 %v971
    %v973 = vpop.xlane.xlu0 %972
    %v974 = vsel %vm147, %v970, 0.0
    %975 = vadd.xlane.f32.xlu0 %v974
    %v976 = vpop.xlane.xlu0 %975
    %v977 = vrcp.pop %v973
    %v978 = vrcp.pop %v976
    %v979 = vmul.f32 %v968, %v977
    %v980 = vmul.f32 %v970, %v978
    %981 = vrot.lane.b32.xlu0 %v136, 48
    %v982 = vpop.permute.xlu0 %981
    %v985 = vsel %vm147, %v979, 0
    %987 = vmatprep.subr.mxu0 0.0
    %988 = vmatpush1.msra.mxu0 0.0
    %989 = vmatprep.subr.mxu0 0.0
    %990 = vmatpush1.msra.mxu0 0.0
    %991 = vmatprep.subr.mxu0 0.0
    %992 = vmatpush1.msra.mxu0 0.0
    %993 = vmatprep.subr.mxu0 0.0
    %994 = vmatpush1.msra.mxu0 0.0
    %995 = vmatprep.subr.mxu0 0.0
    %996 = vmatpush1.msra.mxu0 0.0
    %997 = vmatprep.subr.mxu0 0.0
    %998 = vmatpush1.msra.mxu0 0.0
    %999 = vmatprep.subr.mxu0 0.0
    %1000 = vmatpush1.msra.mxu0 0.0
    %1001 = vmatprep.subr.mxu0 0.0
    %1002 = vmatpush1.msra.mxu0 0.0
    %1003 = vmatprep.subr.mxu0 0.0
    %1004 = vmatpush1.msra.mxu0 0.0
    %1005 = vmatprep.subr.mxu0 0.0
    %1006 = vmatpush1.msra.mxu0 0.0
    %1007 = vmatprep.subr.mxu0 0.0
    %1008 = vmatpush1.msra.mxu0 0.0
    %1009 = vmatprep.subr.mxu0 0.0
    %1010 = vmatpush1.msra.mxu0 0.0
    %1011 = vmatprep.subr.mxu0 0.0
    %1012 = vmatpush1.msra.mxu0 0.0
    %1013 = vmatprep.subr.mxu0 0.0
    %1014 = vmatpush1.msra.mxu0 0.0
    %1015 = vmatprep.subr.mxu0 0.0
    %1016 = vmatpush1.msra.mxu0 0.0
    %1017 = vmatprep.subr.mxu0 0.0
    %1018 = vmatpush1.msra.mxu0 %v982
    %1019 = vmatprep.subr.mxu0 0.0
    %1020 = vmatpush2.msra.mxu0 0.0
    %1021 = vmatprep.subr.mxu0 0.0
    %1022 = vmatpush2.msra.mxu0 0.0
    %1023 = vmatprep.subr.mxu0 0.0
    %1024 = vmatpush2.msra.mxu0 0.0
    %1025 = vmatprep.subr.mxu0 0.0
    %1026 = vmatpush2.msra.mxu0 0.0
    %1027 = vmatprep.subr.mxu0 0.0
    %1028 = vmatpush2.msra.mxu0 0.0
    %1029 = vmatprep.subr.mxu0 0.0
    %1030 = vmatpush2.msra.mxu0 0.0
    %1031 = vmatprep.subr.mxu0 0.0
    %1032 = vmatpush2.msra.mxu0 0.0
    %1033 = vmatprep.subr.mxu0 0.0
    %1034 = vmatpush2.msra.mxu0 0.0
    %1035 = vmatprep.subr.mxu0 0.0
    %1036 = vmatpush2.msra.mxu0 0.0
    %1037 = vmatprep.subr.mxu0 0.0
    %1038 = vmatpush2.msra.mxu0 0.0
    %1039 = vmatprep.subr.mxu0 0.0
    %1040 = vmatpush2.msra.mxu0 0.0
    %1041 = vmatprep.subr.mxu0 0.0
    %1042 = vmatpush2.msra.mxu0 0.0
    %1043 = vmatprep.subr.mxu0 0.0
    %1044 = vmatpush2.msra.mxu0 0.0
    %1045 = vmatprep.subr.mxu0 0.0
    %1046 = vmatpush2.msra.mxu0 0.0
    %1047 = vmatprep.subr.mxu0 0.0
    %1048 = vmatpush2.msra.mxu0 0.0
    %1049 = vmatprep.subr.mxu0 0.0
    %1050 = vmatpush2.msra.mxu0 0.0
    %1051 = vmatprep.mubr.f32.mxu0 0.0
    %1052 = vmatmul.mubr.f32.gmra.mxu0 %v985
    %v1053 = vpop.f32.mrf.mxu0
    %v1054 = vadd.f32 0.0, %v1053
    %v1055 = vpop.f32.mrf.mxu0
    %1056 = vdwg.mxu0
    %1057 = vrot.lane.b32.xlu0 %v141, 48
    %v1058 = vpop.permute.xlu0 %1057
    %v1061 = vsel %vm147, %v980, 0
    %1063 = vmatprep.subr.mxu0 0.0
    %1064 = vmatpush1.msra.mxu0 0.0
    %1065 = vmatprep.subr.mxu0 0.0
    %1066 = vmatpush1.msra.mxu0 0.0
    %1067 = vmatprep.subr.mxu0 0.0
    %1068 = vmatpush1.msra.mxu0 0.0
    %1069 = vmatprep.subr.mxu0 0.0
    %1070 = vmatpush1.msra.mxu0 0.0
    %1071 = vmatprep.subr.mxu0 0.0
    %1072 = vmatpush1.msra.mxu0 0.0
    %1073 = vmatprep.subr.mxu0 0.0
    %1074 = vmatpush1.msra.mxu0 0.0
    %1075 = vmatprep.subr.mxu0 0.0
    %1076 = vmatpush1.msra.mxu0 0.0
    %1077 = vmatprep.subr.mxu0 0.0
    %1078 = vmatpush1.msra.mxu0 0.0
    %1079 = vmatprep.subr.mxu0 0.0
    %1080 = vmatpush1.msra.mxu0 0.0
    %1081 = vmatprep.subr.mxu0 0.0
    %1082 = vmatpush1.msra.mxu0 0.0
    %1083 = vmatprep.subr.mxu0 0.0
    %1084 = vmatpush1.msra.mxu0 0.0
    %1085 = vmatprep.subr.mxu0 0.0
    %1086 = vmatpush1.msra.mxu0 0.0
    %1087 = vmatprep.subr.mxu0 0.0
    %1088 = vmatpush1.msra.mxu0 0.0
    %1089 = vmatprep.subr.mxu0 0.0
    %1090 = vmatpush1.msra.mxu0 0.0
    %1091 = vmatprep.subr.mxu0 0.0
    %1092 = vmatpush1.msra.mxu0 0.0
    %1093 = vmatprep.subr.mxu0 0.0
    %1094 = vmatpush1.msra.mxu0 %v1058
    %1095 = vmatprep.subr.mxu0 0.0
    %1096 = vmatpush2.msra.mxu0 0.0
    %1097 = vmatprep.subr.mxu0 0.0
    %1098 = vmatpush2.msra.mxu0 0.0
    %1099 = vmatprep.subr.mxu0 0.0
    %1100 = vmatpush2.msra.mxu0 0.0
    %1101 = vmatprep.subr.mxu0 0.0
    %1102 = vmatpush2.msra.mxu0 0.0
    %1103 = vmatprep.subr.mxu0 0.0
    %1104 = vmatpush2.msra.mxu0 0.0
    %1105 = vmatprep.subr.mxu0 0.0
    %1106 = vmatpush2.msra.mxu0 0.0
    %1107 = vmatprep.subr.mxu0 0.0
    %1108 = vmatpush2.msra.mxu0 0.0
    %1109 = vmatprep.subr.mxu0 0.0
    %1110 = vmatpush2.msra.mxu0 0.0
    %1111 = vmatprep.subr.mxu0 0.0
    %1112 = vmatpush2.msra.mxu0 0.0
    %1113 = vmatprep.subr.mxu0 0.0
    %1114 = vmatpush2.msra.mxu0 0.0
    %1115 = vmatprep.subr.mxu0 0.0
    %1116 = vmatpush2.msra.mxu0 0.0
    %1117 = vmatprep.subr.mxu0 0.0
    %1118 = vmatpush2.msra.mxu0 0.0
    %1119 = vmatprep.subr.mxu0 0.0
    %1120 = vmatpush2.msra.mxu0 0.0
    %1121 = vmatprep.subr.mxu0 0.0
    %1122 = vmatpush2.msra.mxu0 0.0
    %1123 = vmatprep.subr.mxu0 0.0
    %1124 = vmatpush2.msra.mxu0 0.0
    %1125 = vmatprep.subr.mxu0 0.0
    %1126 = vmatpush2.msra.mxu0 0.0
    %1127 = vmatprep.mubr.f32.mxu0 0.0
    %1128 = vmatmul.mubr.f32.gmra.mxu0 %v1061
    %v1129 = vpop.f32.mrf.mxu0
    %v1130 = vadd.f32 0.0, %v1129
    %v1131 = vpop.f32.mrf.mxu0
    %1132 = vdwg.mxu0
    %1133 = vrot.lane.b32.xlu0 %v136, 104
    %v1134 = vpop.permute.xlu0 %1133
    %1135 = vrot.lane.b32.xlu0 %v136, 72
    %v1136 = vpop.permute.xlu0 %1135
    %v1137 = vsel %vm147, %v1134, 0
    %v1139 = vsel %vm147, %v1136, 0
    %1141 = vmatprep.subr.mxu0 0.0
    %1142 = vmatpush1.xpose.msra.mxu0 0.0
    %1143 = vmatprep.subr.mxu0 0.0
    %1144 = vmatpush1.xpose.msra.mxu0 0.0
    %1145 = vmatprep.subr.mxu0 0.0
    %1146 = vmatpush1.xpose.msra.mxu0 0.0
    %1147 = vmatprep.subr.mxu0 0.0
    %1148 = vmatpush1.xpose.msra.mxu0 0.0
    %1149 = vmatprep.subr.mxu0 0.0
    %1150 = vmatpush1.xpose.msra.mxu0 0.0
    %1151 = vmatprep.subr.mxu0 0.0
    %1152 = vmatpush1.xpose.msra.mxu0 0.0
    %1153 = vmatprep.subr.mxu0 0.0
    %1154 = vmatpush1.xpose.msra.mxu0 0.0
    %1155 = vmatprep.subr.mxu0 0.0
    %1156 = vmatpush1.xpose.msra.mxu0 0.0
    %1157 = vmatprep.subr.mxu0 0.0
    %1158 = vmatpush1.xpose.msra.mxu0 0.0
    %1159 = vmatprep.subr.mxu0 0.0
    %1160 = vmatpush1.xpose.msra.mxu0 0.0
    %1161 = vmatprep.subr.mxu0 0.0
    %1162 = vmatpush1.xpose.msra.mxu0 0.0
    %1163 = vmatprep.subr.mxu0 0.0
    %1164 = vmatpush1.xpose.msra.mxu0 0.0
    %1165 = vmatprep.subr.mxu0 0.0
    %1166 = vmatpush1.xpose.msra.mxu0 0.0
    %1167 = vmatprep.subr.mxu0 0.0
    %1168 = vmatpush1.xpose.msra.mxu0 0.0
    %1169 = vmatprep.subr.mxu0 0.0
    %1170 = vmatpush1.xpose.msra.mxu0 0.0
    %1171 = vmatprep.subr.mxu0 0.0
    %1172 = vmatpush1.xpose.msra.mxu0 %v1139
    %1173 = vmatprep.subr.mxu0 0.0
    %1174 = vmatpush2.xpose.msra.mxu0 0.0
    %1175 = vmatprep.subr.mxu0 0.0
    %1176 = vmatpush2.xpose.msra.mxu0 0.0
    %1177 = vmatprep.subr.mxu0 0.0
    %1178 = vmatpush2.xpose.msra.mxu0 0.0
    %1179 = vmatprep.subr.mxu0 0.0
    %1180 = vmatpush2.xpose.msra.mxu0 0.0
    %1181 = vmatprep.subr.mxu0 0.0
    %1182 = vmatpush2.xpose.msra.mxu0 0.0
    %1183 = vmatprep.subr.mxu0 0.0
    %1184 = vmatpush2.xpose.msra.mxu0 0.0
    %1185 = vmatprep.subr.mxu0 0.0
    %1186 = vmatpush2.xpose.msra.mxu0 0.0
    %1187 = vmatprep.subr.mxu0 0.0
    %1188 = vmatpush2.xpose.msra.mxu0 0.0
    %1189 = vmatprep.subr.mxu0 0.0
    %1190 = vmatpush2.xpose.msra.mxu0 0.0
    %1191 = vmatprep.subr.mxu0 0.0
    %1192 = vmatpush2.xpose.msra.mxu0 0.0
    %1193 = vmatprep.subr.mxu0 0.0
    %1194 = vmatpush2.xpose.msra.mxu0 0.0
    %1195 = vmatprep.subr.mxu0 0.0
    %1196 = vmatpush2.xpose.msra.mxu0 0.0
    %1197 = vmatprep.subr.mxu0 0.0
    %1198 = vmatpush2.xpose.msra.mxu0 0.0
    %1199 = vmatprep.subr.mxu0 0.0
    %1200 = vmatpush2.xpose.msra.mxu0 0.0
    %1201 = vmatprep.subr.mxu0 0.0
    %1202 = vmatpush2.xpose.msra.mxu0 0.0
    %1203 = vmatprep.subr.mxu0 0.0
    %1204 = vmatpush2.xpose.msra.mxu0 0.0
    %1205 = vmatprep.mubr.f32.mxu0 0.0
    %1206 = vmatmul.mubr.f32.gmra.mxu0 %v1137
    %v1207 = vpop.f32.mrf.mxu0
    %v1208 = vadd.f32 0.0, %v1207
    %v1209 = vpop.f32.mrf.mxu0
    %1210 = vdwg.mxu0
    %1211 = vrot.lane.b32.xlu0 %v141, 104
    %v1212 = vpop.permute.xlu0 %1211
    %1213 = vrot.lane.b32.xlu0 %v141, 72
    %v1214 = vpop.permute.xlu0 %1213
    %v1215 = vsel %vm147, %v1212, 0
    %v1217 = vsel %vm147, %v1214, 0
    %1219 = vmatprep.subr.mxu0 0.0
    %1220 = vmatpush1.xpose.msra.mxu0 0.0
    %1221 = vmatprep.subr.mxu0 0.0
    %1222 = vmatpush1.xpose.msra.mxu0 0.0
    %1223 = vmatprep.subr.mxu0 0.0
    %1224 = vmatpush1.xpose.msra.mxu0 0.0
    %1225 = vmatprep.subr.mxu0 0.0
    %1226 = vmatpush1.xpose.msra.mxu0 0.0
    %1227 = vmatprep.subr.mxu0 0.0
    %1228 = vmatpush1.xpose.msra.mxu0 0.0
    %1229 = vmatprep.subr.mxu0 0.0
    %1230 = vmatpush1.xpose.msra.mxu0 0.0
    %1231 = vmatprep.subr.mxu0 0.0
    %1232 = vmatpush1.xpose.msra.mxu0 0.0
    %1233 = vmatprep.subr.mxu0 0.0
    %1234 = vmatpush1.xpose.msra.mxu0 0.0
    %1235 = vmatprep.subr.mxu0 0.0
    %1236 = vmatpush1.xpose.msra.mxu0 0.0
    %1237 = vmatprep.subr.mxu0 0.0
    %1238 = vmatpush1.xpose.msra.mxu0 0.0
    %1239 = vmatprep.subr.mxu0 0.0
    %1240 = vmatpush1.xpose.msra.mxu0 0.0
    %1241 = vmatprep.subr.mxu0 0.0
    %1242 = vmatpush1.xpose.msra.mxu0 0.0
    %1243 = vmatprep.subr.mxu0 0.0
    %1244 = vmatpush1.xpose.msra.mxu0 0.0
    %1245 = vmatprep.subr.mxu0 0.0
    %1246 = vmatpush1.xpose.msra.mxu0 0.0
    %1247 = vmatprep.subr.mxu0 0.0
    %1248 = vmatpush1.xpose.msra.mxu0 0.0
    %1249 = vmatprep.subr.mxu0 0.0
    %1250 = vmatpush1.xpose.msra.mxu0 %v1217
    %1251 = vmatprep.subr.mxu0 0.0
    %1252 = vmatpush2.xpose.msra.mxu0 0.0
    %1253 = vmatprep.subr.mxu0 0.0
    %1254 = vmatpush2.xpose.msra.mxu0 0.0
    %1255 = vmatprep.subr.mxu0 0.0
    %1256 = vmatpush2.xpose.msra.mxu0 0.0
    %1257 = vmatprep.subr.mxu0 0.0
    %1258 = vmatpush2.xpose.msra.mxu0 0.0
    %1259 = vmatprep.subr.mxu0 0.0
    %1260 = vmatpush2.xpose.msra.mxu0 0.0
    %1261 = vmatprep.subr.mxu0 0.0
    %1262 = vmatpush2.xpose.msra.mxu0 0.0
    %1263 = vmatprep.subr.mxu0 0.0
    %1264 = vmatpush2.xpose.msra.mxu0 0.0
    %1265 = vmatprep.subr.mxu0 0.0
    %1266 = vmatpush2.xpose.msra.mxu0 0.0
    %1267 = vmatprep.subr.mxu0 0.0
    %1268 = vmatpush2.xpose.msra.mxu0 0.0
    %1269 = vmatprep.subr.mxu0 0.0
    %1270 = vmatpush2.xpose.msra.mxu0 0.0
    %1271 = vmatprep.subr.mxu0 0.0
    %1272 = vmatpush2.xpose.msra.mxu0 0.0
    %1273 = vmatprep.subr.mxu0 0.0
    %1274 = vmatpush2.xpose.msra.mxu0 0.0
    %1275 = vmatprep.subr.mxu0 0.0
    %1276 = vmatpush2.xpose.msra.mxu0 0.0
    %1277 = vmatprep.subr.mxu0 0.0
    %1278 = vmatpush2.xpose.msra.mxu0 0.0
    %1279 = vmatprep.subr.mxu0 0.0
    %1280 = vmatpush2.xpose.msra.mxu0 0.0
    %1281 = vmatprep.subr.mxu0 0.0
    %1282 = vmatpush2.xpose.msra.mxu0 0.0
    %1283 = vmatprep.mubr.f32.mxu0 0.0
    %1284 = vmatmul.mubr.f32.gmra.mxu0 %v1215
    %v1285 = vpop.f32.mrf.mxu0
    %v1286 = vadd.f32 0.0, %v1285
    %v1287 = vpop.f32.mrf.mxu0
    %1288 = vdwg.mxu0
    %v1289 = vsel %vm147, %v1208, -inf
    %1290 = vmax.xlane.f32.xlu0 %v1289
    %v1291 = vpop.xlane.xlu0 %1290
    %v1292 = vsel %vm147, %v1286, -inf
    %1293 = vmax.xlane.f32.xlu0 %v1292
    %v1294 = vpop.xlane.xlu0 %1293
    %v1295 = vsub.f32 %v1208, %v1291
    %v1296 = vsub.f32 %v1286, %v1294
    %v1297 = vmul.f32 %v1295, 1.442695
    %v1298 = vpow.pop %v1297
    %v1299 = vmul.f32 %v1296, 1.442695
    %v1300 = vpow.pop %v1299
    %v1301 = vsel %vm147, %v1298, 0.0
    %1302 = vadd.xlane.f32.xlu0 %v1301
    %v1303 = vpop.xlane.xlu0 %1302
    %v1304 = vsel %vm147, %v1300, 0.0
    %1305 = vadd.xlane.f32.xlu0 %v1304
    %v1306 = vpop.xlane.xlu0 %1305
    %v1307 = vrcp.pop %v1303
    %v1308 = vrcp.pop %v1306
    %v1309 = vmul.f32 %v1298, %v1307
    %v1310 = vmul.f32 %v1300, %v1308
    %1311 = vrot.lane.b32.xlu0 %v136, 40
    %v1312 = vpop.permute.xlu0 %1311
    %v1315 = vsel %vm147, %v1309, 0
    %1317 = vmatprep.subr.mxu0 0.0
    %1318 = vmatpush1.msra.mxu0 0.0
    %1319 = vmatprep.subr.mxu0 0.0
    %1320 = vmatpush1.msra.mxu0 0.0
    %1321 = vmatprep.subr.mxu0 0.0
    %1322 = vmatpush1.msra.mxu0 0.0
    %1323 = vmatprep.subr.mxu0 0.0
    %1324 = vmatpush1.msra.mxu0 0.0
    %1325 = vmatprep.subr.mxu0 0.0
    %1326 = vmatpush1.msra.mxu0 0.0
    %1327 = vmatprep.subr.mxu0 0.0
    %1328 = vmatpush1.msra.mxu0 0.0
    %1329 = vmatprep.subr.mxu0 0.0
    %1330 = vmatpush1.msra.mxu0 0.0
    %1331 = vmatprep.subr.mxu0 0.0
    %1332 = vmatpush1.msra.mxu0 0.0
    %1333 = vmatprep.subr.mxu0 0.0
    %1334 = vmatpush1.msra.mxu0 0.0
    %1335 = vmatprep.subr.mxu0 0.0
    %1336 = vmatpush1.msra.mxu0 0.0
    %1337 = vmatprep.subr.mxu0 0.0
    %1338 = vmatpush1.msra.mxu0 0.0
    %1339 = vmatprep.subr.mxu0 0.0
    %1340 = vmatpush1.msra.mxu0 0.0
    %1341 = vmatprep.subr.mxu0 0.0
    %1342 = vmatpush1.msra.mxu0 0.0
    %1343 = vmatprep.subr.mxu0 0.0
    %1344 = vmatpush1.msra.mxu0 0.0
    %1345 = vmatprep.subr.mxu0 0.0
    %1346 = vmatpush1.msra.mxu0 0.0
    %1347 = vmatprep.subr.mxu0 0.0
    %1348 = vmatpush1.msra.mxu0 %v1312
    %1349 = vmatprep.subr.mxu0 0.0
    %1350 = vmatpush2.msra.mxu0 0.0
    %1351 = vmatprep.subr.mxu0 0.0
    %1352 = vmatpush2.msra.mxu0 0.0
    %1353 = vmatprep.subr.mxu0 0.0
    %1354 = vmatpush2.msra.mxu0 0.0
    %1355 = vmatprep.subr.mxu0 0.0
    %1356 = vmatpush2.msra.mxu0 0.0
    %1357 = vmatprep.subr.mxu0 0.0
    %1358 = vmatpush2.msra.mxu0 0.0
    %1359 = vmatprep.subr.mxu0 0.0
    %1360 = vmatpush2.msra.mxu0 0.0
    %1361 = vmatprep.subr.mxu0 0.0
    %1362 = vmatpush2.msra.mxu0 0.0
    %1363 = vmatprep.subr.mxu0 0.0
    %1364 = vmatpush2.msra.mxu0 0.0
    %1365 = vmatprep.subr.mxu0 0.0
    %1366 = vmatpush2.msra.mxu0 0.0
    %1367 = vmatprep.subr.mxu0 0.0
    %1368 = vmatpush2.msra.mxu0 0.0
    %1369 = vmatprep.subr.mxu0 0.0
    %1370 = vmatpush2.msra.mxu0 0.0
    %1371 = vmatprep.subr.mxu0 0.0
    %1372 = vmatpush2.msra.mxu0 0.0
    %1373 = vmatprep.subr.mxu0 0.0
    %1374 = vmatpush2.msra.mxu0 0.0
    %1375 = vmatprep.subr.mxu0 0.0
    %1376 = vmatpush2.msra.mxu0 0.0
    %1377 = vmatprep.subr.mxu0 0.0
    %1378 = vmatpush2.msra.mxu0 0.0
    %1379 = vmatprep.subr.mxu0 0.0
    %1380 = vmatpush2.msra.mxu0 0.0
    %1381 = vmatprep.mubr.f32.mxu0 0.0
    %1382 = vmatmul.mubr.f32.gmra.mxu0 %v1315
    %v1383 = vpop.f32.mrf.mxu0
    %v1384 = vadd.f32 0.0, %v1383
    %v1385 = vpop.f32.mrf.mxu0
    %1386 = vdwg.mxu0
    %1387 = vrot.lane.b32.xlu0 %v141, 40
    %v1388 = vpop.permute.xlu0 %1387
    %v1391 = vsel %vm147, %v1310, 0
    %1393 = vmatprep.subr.mxu0 0.0
    %1394 = vmatpush1.msra.mxu0 0.0
    %1395 = vmatprep.subr.mxu0 0.0
    %1396 = vmatpush1.msra.mxu0 0.0
    %1397 = vmatprep.subr.mxu0 0.0
    %1398 = vmatpush1.msra.mxu0 0.0
    %1399 = vmatprep.subr.mxu0 0.0
    %1400 = vmatpush1.msra.mxu0 0.0
    %1401 = vmatprep.subr.mxu0 0.0
    %1402 = vmatpush1.msra.mxu0 0.0
    %1403 = vmatprep.subr.mxu0 0.0
    %1404 = vmatpush1.msra.mxu0 0.0
    %1405 = vmatprep.subr.mxu0 0.0
    %1406 = vmatpush1.msra.mxu0 0.0
    %1407 = vmatprep.subr.mxu0 0.0
    %1408 = vmatpush1.msra.mxu0 0.0
    %1409 = vmatprep.subr.mxu0 0.0
    %1410 = vmatpush1.msra.mxu0 0.0
    %1411 = vmatprep.subr.mxu0 0.0
    %1412 = vmatpush1.msra.mxu0 0.0
    %1413 = vmatprep.subr.mxu0 0.0
    %1414 = vmatpush1.msra.mxu0 0.0
    %1415 = vmatprep.subr.mxu0 0.0
    %1416 = vmatpush1.msra.mxu0 0.0
    %1417 = vmatprep.subr.mxu0 0.0
    %1418 = vmatpush1.msra.mxu0 0.0
    %1419 = vmatprep.subr.mxu0 0.0
    %1420 = vmatpush1.msra.mxu0 0.0
    %1421 = vmatprep.subr.mxu0 0.0
    %1422 = vmatpush1.msra.mxu0 0.0
    %1423 = vmatprep.subr.mxu0 0.0
    %1424 = vmatpush1.msra.mxu0 %v1388
    %1425 = vmatprep.subr.mxu0 0.0
    %1426 = vmatpush2.msra.mxu0 0.0
    %1427 = vmatprep.subr.mxu0 0.0
    %1428 = vmatpush2.msra.mxu0 0.0
    %1429 = vmatprep.subr.mxu0 0.0
    %1430 = vmatpush2.msra.mxu0 0.0
    %1431 = vmatprep.subr.mxu0 0.0
    %1432 = vmatpush2.msra.mxu0 0.0
    %1433 = vmatprep.subr.mxu0 0.0
    %1434 = vmatpush2.msra.mxu0 0.0
    %1435 = vmatprep.subr.mxu0 0.0
    %1436 = vmatpush2.msra.mxu0 0.0
    %1437 = vmatprep.subr.mxu0 0.0
    %1438 = vmatpush2.msra.mxu0 0.0
    %1439 = vmatprep.subr.mxu0 0.0
    %1440 = vmatpush2.msra.mxu0 0.0
    %1441 = vmatprep.subr.mxu0 0.0
    %1442 = vmatpush2.msra.mxu0 0.0
    %1443 = vmatprep.subr.mxu0 0.0
    %1444 = vmatpush2.msra.mxu0 0.0
    %1445 = vmatprep.subr.mxu0 0.0
    %1446 = vmatpush2.msra.mxu0 0.0
    %1447 = vmatprep.subr.mxu0 0.0
    %1448 = vmatpush2.msra.mxu0 0.0
    %1449 = vmatprep.subr.mxu0 0.0
    %1450 = vmatpush2.msra.mxu0 0.0
    %1451 = vmatprep.subr.mxu0 0.0
    %1452 = vmatpush2.msra.mxu0 0.0
    %1453 = vmatprep.subr.mxu0 0.0
    %1454 = vmatpush2.msra.mxu0 0.0
    %1455 = vmatprep.subr.mxu0 0.0
    %1456 = vmatpush2.msra.mxu0 0.0
    %1457 = vmatprep.mubr.f32.mxu0 0.0
    %1458 = vmatmul.mubr.f32.gmra.mxu0 %v1391
    %v1459 = vpop.f32.mrf.mxu0
    %v1460 = vadd.f32 0.0, %v1459
    %v1461 = vpop.f32.mrf.mxu0
    %1462 = vdwg.mxu0
    %1465 = vrot.lane.b32.xlu0 %v724, 8
    %v1466 = vpop.permute.xlu0 %1465
    %1467 = vrot.lane.b32.xlu0 %v800, 8
    %v1468 = vpop.permute.xlu0 %1467
    %1473 = vrot.lane.b32.xlu0 %v1054, 16
    %v1474 = vpop.permute.xlu0 %1473
    %1475 = vrot.lane.b32.xlu0 %v1130, 16
    %v1476 = vpop.permute.xlu0 %1475
    %1481 = vrot.lane.b32.xlu0 %v1384, 24
    %v1482 = vpop.permute.xlu0 %1481
    %1483 = vrot.lane.b32.xlu0 %v1460, 24
    %v1484 = vpop.permute.xlu0 %1483
    %v1487 = vsel %vm147, %v394, %v1466
    %v1488 = vsel %vm147, %v470, %v1468
    %vm1489 = vcmask 130048
    %v1490 = vsel %vm1489, %v1487, %v1474
    %v1491 = vsel %vm1489, %v1488, %v1476
    %vm1492 = vcmask 195584
    %v1493 = vsel %vm1492, %v1490, %v1482
    %v1494 = vsel %vm1492, %v1491, %v1484
    %v1495 = vld [vmem:[#allocation7] sm:$0xff]
    %v1496 = vld [vmem:[#allocation7 + $0x8] sm:$0xff]
    %v1497 = vld [vmem:[#allocation7 + $0x10] sm:$0xff]
    %v1498 = vld [vmem:[#allocation7 + $0x18] sm:$0xff]
    %v1500 = vsel %vm62, %v1493, 0
    %v1503 = vsel %vm62, %v1494, 0
    %1505 = vmatprep.subr.mxu0 0.0
    %1506 = vmatpush1.msra.mxu0 0.0
    %1507 = vmatprep.subr.mxu0 0.0
    %1508 = vmatpush1.msra.mxu0 0.0
    %1509 = vmatprep.subr.mxu0 0.0
    %1510 = vmatpush1.msra.mxu0 0.0
    %1511 = vmatprep.subr.mxu0 0.0
    %1512 = vmatpush1.msra.mxu0 0.0
    %1513 = vmatprep.subr.mxu0 0.0
    %1514 = vmatpush1.msra.mxu0 0.0
    %1515 = vmatprep.subr.mxu0 0.0
    %1516 = vmatpush1.msra.mxu0 0.0
    %1517 = vmatprep.subr.mxu0 0.0
    %1518 = vmatpush1.msra.mxu0 0.0
    %1519 = vmatprep.subr.mxu0 0.0
    %1520 = vmatpush1.msra.mxu0 0.0
    %1521 = vmatprep.subr.mxu0 0.0
    %1522 = vmatpush1.msra.mxu0 0.0
    %1523 = vmatprep.subr.mxu0 0.0
    %1524 = vmatpush1.msra.mxu0 0.0
    %1525 = vmatprep.subr.mxu0 0.0
    %1526 = vmatpush1.msra.mxu0 0.0
    %1527 = vmatprep.subr.mxu0 0.0
    %1528 = vmatpush1.msra.mxu0 0.0
    %1529 = vmatprep.subr.mxu0 0.0
    %1530 = vmatpush1.msra.mxu0 %v1498
    %1531 = vmatprep.subr.mxu0 0.0
    %1532 = vmatpush1.msra.mxu0 %v1497
    %1533 = vmatprep.subr.mxu0 0.0
    %1534 = vmatpush1.msra.mxu0 %v1496
    %1535 = vmatprep.subr.mxu0 0.0
    %1536 = vmatpush1.msra.mxu0 %v1495
    %1537 = vmatprep.subr.mxu0 0.0
    %1538 = vmatpush2.msra.mxu0 0.0
    %1539 = vmatprep.subr.mxu0 0.0
    %1540 = vmatpush2.msra.mxu0 0.0
    %1541 = vmatprep.subr.mxu0 0.0
    %1542 = vmatpush2.msra.mxu0 0.0
    %1543 = vmatprep.subr.mxu0 0.0
    %1544 = vmatpush2.msra.mxu0 0.0
    %1545 = vmatprep.subr.mxu0 0.0
    %1546 = vmatpush2.msra.mxu0 0.0
    %1547 = vmatprep.subr.mxu0 0.0
    %1548 = vmatpush2.msra.mxu0 0.0
    %1549 = vmatprep.subr.mxu0 0.0
    %1550 = vmatpush2.msra.mxu0 0.0
    %1551 = vmatprep.subr.mxu0 0.0
    %1552 = vmatpush2.msra.mxu0 0.0
    %1553 = vmatprep.subr.mxu0 0.0
    %1554 = vmatpush2.msra.mxu0 0.0
    %1555 = vmatprep.subr.mxu0 0.0
    %1556 = vmatpush2.msra.mxu0 0.0
    %1557 = vmatprep.subr.mxu0 0.0
    %1558 = vmatpush2.msra.mxu0 0.0
    %1559 = vmatprep.subr.mxu0 0.0
    %1560 = vmatpush2.msra.mxu0 0.0
    %1561 = vmatprep.subr.mxu0 0.0
    %1562 = vmatpush2.msra.mxu0 0.0
    %1563 = vmatprep.subr.mxu0 0.0
    %1564 = vmatpush2.msra.mxu0 0.0
    %1565 = vmatprep.subr.mxu0 0.0
    %1566 = vmatpush2.msra.mxu0 0.0
    %1567 = vmatprep.subr.mxu0 0.0
    %1568 = vmatpush2.msra.mxu0 0.0
    %1569 = vmatprep.mubr.f32.mxu0 0.0
    %1570 = vmatmul.mubr.f32.gmra.mxu0 %v1500
    %v1571 = vpop.f32.mrf.mxu0
    %v1572 = vadd.f32 0.0, %v1571
    %v1573 = vpop.f32.mrf.mxu0
    %1574 = vmatprep.mubr.f32.mxu0 0.0
    %1575 = vmatmul.mubr.f32.gmra.mxu0 %v1503
    %v1576 = vpop.f32.mrf.mxu0
    %v1577 = vadd.f32 0.0, %v1576
    %v1578 = vpop.f32.mrf.mxu0
    %1579 = vdwg.mxu0
    %1580 = vst.msk [vmem:[#allocation8] sm:$0xff] %vm62, %v1572
    %1581 = vst.msk [vmem:[#allocation8 + $0x8] sm:$0xff] %vm62, %v1577
    // Predicated region
    $region26: #{tpu_custom_call.1} parent=1 // pred_check
      _
    $region27: #{tpu_custom_call.1} parent=1 // pred_check_branch
      %1583 = sbr.rel (0) target = $region29
    $region28: #{tpu_custom_call.1} parent=1 // pred_region
      %s1585 = ssub.s32 256, 256
      %1586 = vsyncadd [#allocation4], %s1585
      %s1587 = sshll.u32 [#allocation8], 4
      %s1588 = int_to_ptr.vmem [resolvable:$true] %s1587
      %1593 = dma.vmem_to_hbm [thread:$0]  %s1588, 256, %s3, [#allocation4], 128, 128, 8
    $region29: #{tpu_custom_call.1} parent=1 // pred_fallthru
      _
    // Predicated region
    $region30: #{tpu_custom_call.1} parent=1 // pred_check
      _
    $region31: #{tpu_custom_call.1} parent=1 // pred_check_branch
      %1595 = sbr.rel (0) target = $region33
    $region32: #{tpu_custom_call.1} parent=1 // pred_region
      %1596 = dma.done [#allocation4], 256
    $region33: #{tpu_custom_call.1} parent=1 // pred_fallthru
      _
    %1597 = vsyncpa [#allocation3], 1
    %1598 = vsyncpa [#allocation6], 1
    %1599 = vsyncpa [#allocation4], 1

</llo_original>
